<compile_context>
chip_gen: v5e
topology: v5e:2x2
jax: 0.10.0
libtpu: 0.0.40
codegen_flags: <defaults>
</compile_context>

<pallas_src>
import jax
import jax.numpy as jnp
from jax.experimental import pallas as pl
from jax.experimental.pallas import tpu as pltpu

EPS = 1e-6
INV_SQRT2 = 0.7071067811865476


def _patch_merger_kernel(x_ref, seg_dn_ref, seg_up_ref, w1_ref, b1_ref,
                         w2_ref, b2_ref, o_ref, xn_ref, acc_ref):
    j = pl.program_id(1)

    # ---- per-sub-patch LayerNorm (once per row tile, at j == 0) ----
    @pl.when(j == 0)
    def _():
        xb = x_ref[...]                              # (TM, hidden) bf16
        xf = xb.astype(jnp.float32)
        # E[x] and E[x^2] via two independent bf16 segment matmuls
        # (1/input_size folded into seg_dn); f32 accumulation on the MXU.
        mean = jnp.dot(xb, seg_dn_ref[...],
                       preferred_element_type=jnp.float32)          # (TM, m2)
        ex2 = jnp.dot((xf * xf).astype(jnp.bfloat16), seg_dn_ref[...],
                      preferred_element_type=jnp.float32)            # (TM, m2)
        var = jnp.maximum(ex2 - mean * mean, 0.0)
        rstd = jax.lax.rsqrt(var + EPS)
        # Broadcast per-sub-patch scale/shift back to full hidden width.
        scale = jnp.dot(rstd.astype(jnp.bfloat16), seg_up_ref[...],
                        preferred_element_type=jnp.float32)           # (TM, hidden)
        shift = jnp.dot((-mean * rstd).astype(jnp.bfloat16), seg_up_ref[...],
                        preferred_element_type=jnp.float32)
        # gamma/beta are folded into w1/b1 in the wrapper -> no affine here.
        xn_ref[...] = (xf * scale + shift).astype(jnp.bfloat16)
        acc_ref[...] = jnp.zeros_like(acc_ref)

    # ---- MLP: Linear -> exact-erf GELU -> Linear, hidden axis (j) tiled ----
    h = jnp.dot(xn_ref[...], w1_ref[...],
                preferred_element_type=jnp.float32) + b1_ref[...]
    h = 0.5 * h * (1.0 + jax.lax.erf(h * INV_SQRT2))     # torch GELU() parity
    acc_ref[...] += jnp.dot(h.astype(jnp.bfloat16), w2_ref[...],
                            preferred_element_type=jnp.float32)

    @pl.when(j == pl.num_programs(1) - 1)
    def _():
        o_ref[...] = (acc_ref[...] + b2_ref[...]).astype(o_ref.dtype)


def _physical_vmem_bytes():
    try:
        cap = int(getattr(pltpu.get_tpu_info(), "vmem_capacity_bytes", 0))
        if cap >= (32 << 20):
            return cap
    except Exception:
        pass
    return 64 << 20   # safe lower bound (v7x physical VMEM)


def _pick_tile_rows(n_rows, hidden, min_steps=8, temp_budget=16 << 20):
    tm = 512
    # keep in-kernel f32 temporaries (~4 x TM x hidden x 4B) bounded
    while tm > 8 and 16 * tm * hidden > temp_budget:
        tm //= 2
    # enough grid steps for real pipelining (>=4 per TensorCore on v7x)
    while tm > 8 and pl.cdiv(n_rows, tm) < min_steps:
        tm //= 2
    return max(tm, 8)


def _pick_tn(hidden, output_size, weight_budget):
    """Largest hidden-block width whose w1/w2 blocks fit the VMEM weight budget.

    tn == hidden -> weights fully resident (single-buffered via Buffered(1));
    otherwise the hidden axis is streamed (blocks double-buffered for overlap).
    """
    candidates = [hidden] + [t for t in (2048, 1024, 512, 256, 128)
                             if t < hidden and hidden % t == 0]
    for tn in candidates:
        nbuf = 1 if tn == hidden else 2
        wbytes = nbuf * ((hidden * tn + tn * output_size) * 2 + tn * 4)
        if wbytes <= weight_budget:
            return tn
    return candidates[-1]


def patch_merger(x, gamma, beta, w1, b1, w2, b2, spatial_merge_size=2):
    """x: (seq, input_size); w1/w2 as (in, out). Returns (seq//merge^2, output_size)."""
    seq, input_size = x.shape
    merge2 = spatial_merge_size ** 2
    hidden = input_size * merge2
    assert w1.shape == (hidden, hidden)
    output_size = w2.shape[1]
    assert (seq * input_size) % hidden == 0
    n_rows = (seq * input_size) // hidden
    out_dtype = x.dtype
    out_isz = jnp.dtype(out_dtype).itemsize

    # ---- wrapper-side folds (free at trace time / tiny one-off XLA ops) ----
    # Free HBM metadata reshape (== torch .view(-1, hidden)); bf16 streaming
    # halves activation HBM traffic (the kernel is bandwidth-bound here).
    x2 = x.reshape(n_rows, hidden).astype(jnp.bfloat16)

    # Fold LayerNorm affine into the first linear.
    g_t = jnp.tile(gamma.astype(jnp.float32), merge2)
    beta_t = jnp.tile(beta.astype(jnp.float32), merge2)
    w1f = w1.astype(jnp.float32)
    w1_b = (g_t[:, None] * w1f).astype(jnp.bfloat16)
    b1_r = (beta_t @ w1f + b1.astype(jnp.float32)).reshape(1, hidden)
    w2_b = w2.astype(jnp.bfloat16)
    b2_r = b2.astype(jnp.float32).reshape(1, output_size)

    # 0/1 segment matrices (bf16); 1/input_size folded into the down-proj so
    # its matmul yields E[.] directly (1/32 etc. is exact in bf16).
    sub_id = jnp.arange(hidden, dtype=jnp.int32) // input_size
    onehot = (sub_id[:, None] == jnp.arange(merge2, dtype=jnp.int32)[None, :]
              ).astype(jnp.float32)
    seg_dn = (onehot / input_size).astype(jnp.bfloat16)     # (hidden, merge2)
    seg_up = onehot.T.astype(jnp.bfloat16)                  # (merge2, hidden)

    # ---- tiling / VMEM budgeting ----
    phys = _physical_vmem_bytes()
    budget = phys - (8 << 20)                               # headroom

    tm = _pick_tile_rows(n_rows, hidden)
    act_bytes = (2 * tm * hidden * 2            # x tile (double-buffered, bf16)
                 + tm * hidden * 2              # xn scratch (bf16)
                 + tm * output_size * 4         # f32 accumulator scratch
                 + 2 * tm * output_size * out_isz   # out tile (double-buffered)
                 + 4 * tm * hidden * 4          # in-kernel f32 temporaries
                 + tm * hidden * 4              # h temporary (worst case tn=hidden)
                 + 2 * hidden * merge2 * 2 * 2)  # segment matrices
    tn = _pick_tn(hidden, output_size, max(budget - act_bytes, 8 << 20))
    n_j = hidden // tn

    n_steps = pl.cdiv(n_rows, tm)
    n_rows_pad = n_steps * tm
    if n_rows_pad != n_rows:
        x2 = jnp.pad(x2, ((0, n_rows_pad - n_rows), (0, 0)))

    w_block_bytes = ((2 if n_j > 1 else 1)
                     * ((hidden * tn + tn * output_size) * 2 + tn * 4 + output_size * 4))
    need = act_bytes + w_block_bytes + (4 << 20)
    vmem_limit = int(min(max(need, 32 << 20), budget))

    flops = 2 * n_rows_pad * hidden * (hidden + output_size)
    bytes_accessed = (x2.size * 2
                      + (w1_b.size + w2_b.size) * 2 * (n_steps if n_j > 1 else 1)
                      + n_rows_pad * output_size * out_isz)
    cost = pl.CostEstimate(flops=int(flops),
                           transcendentals=int(n_rows_pad * (hidden + merge2)),
                           bytes_accessed=int(bytes_accessed))

    # Single-buffer truly constant inputs (weights when resident, segments,
    # biases) so they occupy 1x their bytes of VMEM; keep default
    # double-buffering for anything whose block index changes.
    resident = dict(pipeline_mode=pl.Buffered(1))
    w_mode = resident if n_j == 1 else {}

    # NOTE(v7x): leading "parallel" row axis is the megacore split axis; verify
    # with xprof that both TensorCores take half the row grid.
    out = pl.pallas_call(
        _patch_merger_kernel,
        out_shape=jax.ShapeDtypeStruct((n_rows_pad, output_size), out_dtype),
        grid=(n_steps, n_j),
        in_specs=[
            pl.BlockSpec((tm, hidden), lambda i, j: (i, 0)),                  # x tile
            pl.BlockSpec((hidden, merge2), lambda i, j: (0, 0), **resident),  # seg down
            pl.BlockSpec((merge2, hidden), lambda i, j: (0, 0), **resident),  # seg up
            pl.BlockSpec((hidden, tn), lambda i, j: (0, j), **w_mode),        # w1 cols
            pl.BlockSpec((1, tn), lambda i, j: (0, j), **w_mode),             # b1
            pl.BlockSpec((tn, output_size), lambda i, j: (j, 0), **w_mode),   # w2 rows
            pl.BlockSpec((1, output_size), lambda i, j: (0, 0), **resident),  # b2
        ],
        out_specs=pl.BlockSpec((tm, output_size), lambda i, j: (i, 0)),
        scratch_shapes=[pltpu.VMEM((tm, hidden), jnp.bfloat16),      # normalized x
                        pltpu.VMEM((tm, output_size), jnp.float32)], # accumulator
        compiler_params=pltpu.CompilerParams(
            dimension_semantics=("parallel", "arbitrary"),
            vmem_limit_bytes=vmem_limit),
        cost_estimate=cost,
    )(x2, seg_dn, seg_up, w1_b, b1_r, w2_b, b2_r)

    return out[:n_rows] if n_rows_pad != n_rows else out


def patch_merger_ref(x, gamma, beta, w1, b1, w2, b2, spatial_merge_size=2):
    """Pure-f32 JAX reference mirroring the PyTorch module exactly."""
    merge2 = spatial_merge_size ** 2
    hidden = x.shape[-1] * merge2
    mean = jnp.mean(x, axis=-1, keepdims=True)
    var = jnp.mean((x - mean) ** 2, axis=-1, keepdims=True)
    xn = (x - mean) * jax.lax.rsqrt(var + EPS) * gamma + beta
    h = xn.reshape(-1, hidden) @ w1 + b1
    h = 0.5 * h * (1.0 + jax.lax.erf(h * INV_SQRT2))
    return h @ w2 + b2


if __name__ == "__main__":
    # Small shapes consistent with the module:
    #   input_size=32, spatial_merge_size=2 -> hidden = 32*4 = 128
    #   output_size=128, seq=4096 -> 1024 merged rows -> row grid of 8 tiles
    input_size = 32
    spatial_merge_size = 2
    hidden = input_size * spatial_merge_size ** 2     # 128
    output_size = 128
    seq = 4096

    key = jax.random.PRNGKey(0)
    kx, kg, kb, kw1, kb1, kw2, kb2 = jax.random.split(key, 7)

    x = jax.random.normal(kx, (seq, input_size), dtype=jnp.float32)
    gamma = 1.0 + 0.1 * jax.random.normal(kg, (input_size,), dtype=jnp.float32)
    beta = 0.1 * jax.random.normal(kb, (input_size,), dtype=jnp.float32)
    w1 = 0.05 * jax.random.normal(kw1, (hidden, hidden), dtype=jnp.float32)
    b1 = 0.01 * jax.random.normal(kb1, (hidden,), dtype=jnp.float32)
    w2 = 0.05 * jax.random.normal(kw2, (hidden, output_size), dtype=jnp.float32)
    b2 = 0.01 * jax.random.normal(kb2, (output_size,), dtype=jnp.float32)

    out = jax.block_until_ready(
        patch_merger(x, gamma, beta, w1, b1, w2, b2, spatial_merge_size))

    ref = patch_merger_ref(x, gamma, beta, w1, b1, w2, b2, spatial_merge_size)
    n_rows = seq * input_size // hidden
    assert out.shape == ref.shape == (n_rows, output_size)
    max_err = float(jnp.max(jnp.abs(out - ref)))
    # Kernel streams activations and matmul operands in bf16 (f32 accumulate),
    # reference is pure f32 -> compare at bf16-policy tolerance.
    assert jnp.allclose(out, ref, rtol=3e-2, atol=3e-2), (
        f"mismatch vs reference (max abs err {max_err})")

    print("KERNEL_OK")
</pallas_src>

<mosaic_0001>
module attributes {stable_mosaic.version = 11 : i64} {
  func.func @_patch_merger_kernel(%arg0: i32, %arg1: i32, %arg2: memref<128x128xbf16, #tpu.memory_space<vmem>>, %arg3: memref<128x4xbf16, #tpu.memory_space<vmem>>, %arg4: memref<4x128xbf16, #tpu.memory_space<vmem>>, %arg5: memref<128x128xbf16, #tpu.memory_space<vmem>>, %arg6: memref<1x128xf32, #tpu.memory_space<vmem>>, %arg7: memref<128x128xbf16, #tpu.memory_space<vmem>>, %arg8: memref<1x128xf32, #tpu.memory_space<vmem>>, %arg9: memref<128x128xf32, #tpu.memory_space<vmem>>, %arg10: memref<128x128xbf16, #tpu.memory_space<vmem>>, %arg11: memref<128x128xf32, #tpu.memory_space<vmem>>) attributes {dimension_semantics = [#tpu.dimension_semantics<parallel>, #tpu.dimension_semantics<arbitrary>], iteration_bounds = array<i64: 8, 1>, scalar_prefetch = 0 : i64, scratch_operands = 2 : i64, tpu.core_type = #tpu.core_type<tc>, window_params = [{transform_indices = @transform_0, window_bounds = array<i64: 128, 128>}, {pipeline_mode = #tpu.pipeline_mode<synchronous>, transform_indices = @transform_1, window_bounds = array<i64: 128, 4>}, {pipeline_mode = #tpu.pipeline_mode<synchronous>, transform_indices = @transform_2, window_bounds = array<i64: 4, 128>}, {pipeline_mode = #tpu.pipeline_mode<synchronous>, transform_indices = @transform_3, window_bounds = array<i64: 128, 128>}, {pipeline_mode = #tpu.pipeline_mode<synchronous>, transform_indices = @transform_4, window_bounds = array<i64: 1, 128>}, {pipeline_mode = #tpu.pipeline_mode<synchronous>, transform_indices = @transform_5, window_bounds = array<i64: 128, 128>}, {pipeline_mode = #tpu.pipeline_mode<synchronous>, transform_indices = @transform_6, window_bounds = array<i64: 1, 128>}, {transform_indices = @transform_7, window_bounds = array<i64: 128, 128>}]} {
    %c0_i32 = arith.constant 0 : i32
    %0 = arith.cmpi eq, %arg1, %c0_i32 : i32
    %1 = arith.extui %0 : i1 to i32
    %c0_i32_0 = arith.constant 0 : i32
    %2 = arith.cmpi ne, %1, %c0_i32_0 : i32
    scf.if %2 {
      %c0_18 = arith.constant 0 : index
      %c0_19 = arith.constant 0 : index
      %26 = vector.load %arg2[%c0_18, %c0_19] : memref<128x128xbf16, #tpu.memory_space<vmem>>, vector<128x128xbf16>
      %27 = arith.extf %26 : vector<128x128xbf16> to vector<128x128xf32>
      %c0_20 = arith.constant 0 : index
      %c0_21 = arith.constant 0 : index
      %28 = vector.load %arg3[%c0_20, %c0_21] : memref<128x4xbf16, #tpu.memory_space<vmem>>, vector<128x4xbf16>
      %cst_22 = arith.constant dense<0.000000e+00> : vector<128x4xf32>
      %29 = tpu.matmul %26, %28, %cst_22 {dimension_numbers = #tpu.dot_dimension_numbers<[1], [0], [0], [1], [0, 0, 1, 1], [], []>} : vector<128x128xbf16>, vector<128x4xbf16>, vector<128x4xf32> -> vector<128x4xf32>
      %30 = arith.mulf %27, %27 : vector<128x128xf32>
      %31 = arith.truncf %30 : vector<128x128xf32> to vector<128x128xbf16>
      %c0_23 = arith.constant 0 : index
      %c0_24 = arith.constant 0 : index
      %32 = vector.load %arg3[%c0_23, %c0_24] : memref<128x4xbf16, #tpu.memory_space<vmem>>, vector<128x4xbf16>
      %cst_25 = arith.constant dense<0.000000e+00> : vector<128x4xf32>
      %33 = tpu.matmul %31, %32, %cst_25 {dimension_numbers = #tpu.dot_dimension_numbers<[1], [0], [0], [1], [0, 0, 1, 1], [], []>} : vector<128x128xbf16>, vector<128x4xbf16>, vector<128x4xf32> -> vector<128x4xf32>
      %34 = arith.mulf %29, %29 : vector<128x4xf32>
      %35 = arith.subf %33, %34 : vector<128x4xf32>
      %cst_26 = arith.constant 0.000000e+00 : f32
      %36 = vector.broadcast %cst_26 : f32 to vector<128x4xf32>
      %37 = arith.maximumf %35, %36 : vector<128x4xf32>
      %cst_27 = arith.constant 9.99999997E-7 : f32
      %38 = vector.broadcast %cst_27 : f32 to vector<128x4xf32>
      %39 = arith.addf %37, %38 : vector<128x4xf32>
      %40 = math.rsqrt %39 : vector<128x4xf32>
      %41 = arith.truncf %40 : vector<128x4xf32> to vector<128x4xbf16>
      %c0_28 = arith.constant 0 : index
      %c0_29 = arith.constant 0 : index
      %42 = vector.load %arg4[%c0_28, %c0_29] : memref<4x128xbf16, #tpu.memory_space<vmem>>, vector<4x128xbf16>
      %cst_30 = arith.constant dense<0.000000e+00> : vector<128x128xf32>
      %43 = tpu.matmul %41, %42, %cst_30 {dimension_numbers = #tpu.dot_dimension_numbers<[1], [0], [0], [1], [0, 0, 1, 1], [], []>} : vector<128x4xbf16>, vector<4x128xbf16>, vector<128x128xf32> -> vector<128x128xf32>
      %cst_31 = arith.constant 0.000000e+00 : f32
      %44 = vector.broadcast %cst_31 : f32 to vector<128x4xf32>
      %45 = arith.subf %44, %29 : vector<128x4xf32>
      %46 = arith.mulf %45, %40 : vector<128x4xf32>
      %47 = arith.truncf %46 : vector<128x4xf32> to vector<128x4xbf16>
      %c0_32 = arith.constant 0 : index
      %c0_33 = arith.constant 0 : index
      %48 = vector.load %arg4[%c0_32, %c0_33] : memref<4x128xbf16, #tpu.memory_space<vmem>>, vector<4x128xbf16>
      %cst_34 = arith.constant dense<0.000000e+00> : vector<128x128xf32>
      %49 = tpu.matmul %47, %48, %cst_34 {dimension_numbers = #tpu.dot_dimension_numbers<[1], [0], [0], [1], [0, 0, 1, 1], [], []>} : vector<128x4xbf16>, vector<4x128xbf16>, vector<128x128xf32> -> vector<128x128xf32>
      %50 = arith.mulf %27, %43 : vector<128x128xf32>
      %51 = arith.addf %50, %49 : vector<128x128xf32>
      %52 = arith.truncf %51 : vector<128x128xf32> to vector<128x128xbf16>
      %c0_35 = arith.constant 0 : index
      %c0_36 = arith.constant 0 : index
      %53 = vector.load %arg10[%c0_35, %c0_36] : memref<128x128xbf16, #tpu.memory_space<vmem>>, vector<128x128xbf16>
      tpu.vector_store %arg10[%c0_35, %c0_36], %52 {strides = array<i32>} : memref<128x128xbf16, #tpu.memory_space<vmem>>, vector<128x128xbf16>,
      %cst_37 = arith.constant 0.000000e+00 : f32
      %54 = vector.broadcast %cst_37 : f32 to vector<128x128xf32>
      %c0_38 = arith.constant 0 : index
      %c0_39 = arith.constant 0 : index
      %55 = vector.load %arg11[%c0_38, %c0_39] : memref<128x128xf32, #tpu.memory_space<vmem>>, vector<128x128xf32>
      tpu.vector_store %arg11[%c0_38, %c0_39], %54 {strides = array<i32>} : memref<128x128xf32, #tpu.memory_space<vmem>>, vector<128x128xf32>,
    } else {
    }
    %c0 = arith.constant 0 : index
    %c0_1 = arith.constant 0 : index
    %3 = vector.load %arg10[%c0, %c0_1] : memref<128x128xbf16, #tpu.memory_space<vmem>>, vector<128x128xbf16>
    %c0_2 = arith.constant 0 : index
    %c0_3 = arith.constant 0 : index
    %4 = vector.load %arg5[%c0_2, %c0_3] : memref<128x128xbf16, #tpu.memory_space<vmem>>, vector<128x128xbf16>
    %cst = arith.constant dense<0.000000e+00> : vector<128x128xf32>
    %5 = tpu.matmul %3, %4, %cst {dimension_numbers = #tpu.dot_dimension_numbers<[1], [0], [0], [1], [0, 0, 1, 1], [], []>} : vector<128x128xbf16>, vector<128x128xbf16>, vector<128x128xf32> -> vector<128x128xf32>
    %c0_4 = arith.constant 0 : index
    %c0_5 = arith.constant 0 : index
    %6 = vector.load %arg6[%c0_4, %c0_5] : memref<1x128xf32, #tpu.memory_space<vmem>>, vector<1x128xf32>
    %7 = vector.broadcast %6 : vector<1x128xf32> to vector<128x128xf32>
    %8 = arith.addf %5, %7 : vector<128x128xf32>
    %cst_6 = arith.constant 5.000000e-01 : f32
    %9 = vector.broadcast %cst_6 : f32 to vector<128x128xf32>
    %10 = arith.mulf %9, %8 : vector<128x128xf32>
    %cst_7 = arith.constant 0.707106769 : f32
    %11 = vector.broadcast %cst_7 : f32 to vector<128x128xf32>
    %12 = arith.mulf %8, %11 : vector<128x128xf32>
    %13 = math.erf %12 : vector<128x128xf32>
    %cst_8 = arith.constant 1.000000e+00 : f32
    %14 = vector.broadcast %cst_8 : f32 to vector<128x128xf32>
    %15 = arith.addf %14, %13 : vector<128x128xf32>
    %16 = arith.mulf %10, %15 : vector<128x128xf32>
    %c0_9 = arith.constant 0 : index
    %c0_10 = arith.constant 0 : index
    %17 = vector.load %arg11[%c0_9, %c0_10] : memref<128x128xf32, #tpu.memory_space<vmem>>, vector<128x128xf32>
    %18 = arith.truncf %16 : vector<128x128xf32> to vector<128x128xbf16>
    %c0_11 = arith.constant 0 : index
    %c0_12 = arith.constant 0 : index
    %19 = vector.load %arg7[%c0_11, %c0_12] : memref<128x128xbf16, #tpu.memory_space<vmem>>, vector<128x128xbf16>
    %cst_13 = arith.constant dense<0.000000e+00> : vector<128x128xf32>
    %20 = tpu.matmul %18, %19, %cst_13 {dimension_numbers = #tpu.dot_dimension_numbers<[1], [0], [0], [1], [0, 0, 1, 1], [], []>} : vector<128x128xbf16>, vector<128x128xbf16>, vector<128x128xf32> -> vector<128x128xf32>
    %21 = arith.addf %17, %20 : vector<128x128xf32>
    %c0_14 = arith.constant 0 : index
    %c0_15 = arith.constant 0 : index
    %22 = vector.load %arg11[%c0_14, %c0_15] : memref<128x128xf32, #tpu.memory_space<vmem>>, vector<128x128xf32>
    tpu.vector_store %arg11[%c0_14, %c0_15], %21 {strides = array<i32>} : memref<128x128xf32, #tpu.memory_space<vmem>>, vector<128x128xf32>,
    %c0_i32_16 = arith.constant 0 : i32
    %23 = arith.cmpi eq, %arg1, %c0_i32_16 : i32
    %24 = arith.extui %23 : i1 to i32
    %c0_i32_17 = arith.constant 0 : i32
    %25 = arith.cmpi ne, %24, %c0_i32_17 : i32
    scf.if %25 {
      %c0_18 = arith.constant 0 : index
      %c0_19 = arith.constant 0 : index
      %26 = vector.load %arg11[%c0_18, %c0_19] : memref<128x128xf32, #tpu.memory_space<vmem>>, vector<128x128xf32>
      %c0_20 = arith.constant 0 : index
      %c0_21 = arith.constant 0 : index
      %27 = vector.load %arg8[%c0_20, %c0_21] : memref<1x128xf32, #tpu.memory_space<vmem>>, vector<1x128xf32>
      %28 = vector.broadcast %27 : vector<1x128xf32> to vector<128x128xf32>
      %29 = arith.addf %26, %28 : vector<128x128xf32>
      %c0_22 = arith.constant 0 : index
      %c0_23 = arith.constant 0 : index
      %30 = vector.load %arg9[%c0_22, %c0_23] : memref<128x128xf32, #tpu.memory_space<vmem>>, vector<128x128xf32>
      tpu.vector_store %arg9[%c0_22, %c0_23], %29 {strides = array<i32>} : memref<128x128xf32, #tpu.memory_space<vmem>>, vector<128x128xf32>,
    } else {
    }
    return
  }
  func.func @transform_0(%arg0: i32, %arg1: i32) -> (i32, i32) {
    %c0_i32 = arith.constant 0 : i32
    %c0_i32_0 = arith.constant 0 : i32
    return %arg0, %c0_i32 : i32, i32
  }
  func.func @transform_1(%arg0: i32, %arg1: i32) -> (i32, i32) {
    %c0_i32 = arith.constant 0 : i32
    %c0_i32_0 = arith.constant 0 : i32
    %c0_i32_1 = arith.constant 0 : i32
    return %c0_i32, %c0_i32_0 : i32, i32
  }
  func.func @transform_2(%arg0: i32, %arg1: i32) -> (i32, i32) {
    %c0_i32 = arith.constant 0 : i32
    %c0_i32_0 = arith.constant 0 : i32
    %c0_i32_1 = arith.constant 0 : i32
    return %c0_i32, %c0_i32_0 : i32, i32
  }
  func.func @transform_3(%arg0: i32, %arg1: i32) -> (i32, i32) {
    %c0_i32 = arith.constant 0 : i32
    %c0_i32_0 = arith.constant 0 : i32
    return %c0_i32, %arg1 : i32, i32
  }
  func.func @transform_4(%arg0: i32, %arg1: i32) -> (i32, i32) {
    %c0_i32 = arith.constant 0 : i32
    %c0_i32_0 = arith.constant 0 : i32
    return %c0_i32, %arg1 : i32, i32
  }
  func.func @transform_5(%arg0: i32, %arg1: i32) -> (i32, i32) {
    %c0_i32 = arith.constant 0 : i32
    %c0_i32_0 = arith.constant 0 : i32
    return %arg1, %c0_i32 : i32, i32
  }
  func.func @transform_6(%arg0: i32, %arg1: i32) -> (i32, i32) {
    %c0_i32 = arith.constant 0 : i32
    %c0_i32_0 = arith.constant 0 : i32
    %c0_i32_1 = arith.constant 0 : i32
    return %c0_i32, %c0_i32_0 : i32, i32
  }
  func.func @transform_7(%arg0: i32, %arg1: i32) -> (i32, i32) {
    %c0_i32 = arith.constant 0 : i32
    %c0_i32_0 = arith.constant 0 : i32
    return %arg0, %c0_i32 : i32, i32
  }
}

</mosaic_0001>

<llo_original>
// kernel: tpu_custom_call.1
$region0: #{tpu_custom_call.1}
  #allocation0 [shape = 'u32[]', space=smem, size = 0x4, offset = 0x4, fixed_abs, tag = 'smem constant byte address 0x4 - core index']
  #allocation1 [shape = 'u32[72,128]{1,0:T(1,128)}', space=vmem, size = 0x9000, scoped, tag = 'internal scratch']
  #allocation2 [shape = 'bf16[128,128]{1,0:T(8,128)(2,1)}', space=vmem, size = 0x8000, scoped, tag = 'scratch operand']
  #allocation3 [shape = 'f32[128,128]{1,0:T(8,128)}', space=vmem, size = 0x10000, scoped, tag = 'scratch operand']
  %s0 = inlined_call_operand.hbm [shape: bf16[1024,128], index: 0, kind: input, shape index: {}]
  %s1 = inlined_call_operand.vmem [shape: bf16[128,4], index: 1, kind: input, shape index: {}]
  %s2 = inlined_call_operand.vmem [shape: bf16[4,128], index: 2, kind: input, shape index: {}]
  %s3 = inlined_call_operand.vmem [shape: bf16[128,128], index: 3, kind: input, shape index: {}]
  %s4 = inlined_call_operand.vmem [shape: f32[1,128], index: 4, kind: input, shape index: {}]
  %s5 = inlined_call_operand.hbm [shape: bf16[128,128], index: 5, kind: input, shape index: {}]
  %s6 = inlined_call_operand.vmem [shape: f32[1,128], index: 6, kind: input, shape index: {}]
  %s7 = inlined_call_operand.hbm [shape: f32[1024,128], index: 7, kind: output, shape index: {}]
  %s8 = sld [smem:[#allocation0]]
  $region77: #{tpu_custom_call.1} parent=0
    _
  %s10 = ssub.s32 1, %s8
  %s11 = scalar_select 0, %s10, %s8
  $region1: #{tpu_custom_call.1} parent=0
    #allocation4 [shape = 'u8[65536]{0}', space=vmem, size = 0x10000, scoped, tag = 'input window, operand 0']
    #allocation5 [shape = 's32[2]{0}', space=sflag, size = 0x8, scoped, tag = 'scoped memory for tpu_custom_call.1']
    #allocation6 [shape = 's32[2]{0}', space=sflag, size = 0x8, scoped, tag = 'scoped memory for tpu_custom_call.1']
    #allocation7 [shape = 'u8[32768]{0}', space=vmem, size = 0x8000, scoped, tag = 'input window, operand 5, single buffered']
    #allocation8 [shape = 's32[1]{0}', space=sflag, size = 0x4, scoped, tag = 'scoped memory for tpu_custom_call.1']
    #allocation9 [shape = 'u8[131072]{0}', space=vmem, size = 0x20000, scoped, tag = 'output window, operand 0']
    %12 = vsyncpa [#allocation5], 0
    %s13 = scalar_lea.sflag [#allocation5], 1
    %14 = vsyncpa %s13, 0
    %15 = vsyncpa [#allocation8], 0
    %16 = vsyncpa [#allocation6], 0
    %s17 = scalar_lea.sflag [#allocation6], 1
    %18 = vsyncpa %s17, 0
    loop: start=0, step=1, limit=10
    $region2: #{tpu_custom_call.1} parent=1 // loop_pre_header
      _
    $region3: #{tpu_custom_call.1} parent=1 // loop_header
      %s20 = sphi 0, %s24
      %p21 = scmp.ge.s32.totalorder %s20, 10
      %s27 = sphi 0, %s39
      %s28 = sphi 0, %s35
      %s29 = sphi 0, %s27
      %s30 = sphi 0, %s28
      %s31 = sphi 0, %s29
      %s32 = sphi 0, %s30
      %s42 = sphi 0, %s44
      %s45 = sphi 0, %s42
      %s46 = sphi 0, %s45
      %s62 = sphi 0, %s46
      %s66 = sphi 0, %s66
      %s68 = sphi 0, %s66
      %s69 = sphi 0, %s68
      %s83 = sphi 0, %s69
      %s87 = sphi 0, %s87
      %s89 = sphi 0, %s87
      %s90 = sphi 0, %s89
      %s104 = sphi 0, %s90
      %s110 = sphi 0, %s112
      %s113 = sphi 0, %s110
      %s114 = sphi 0, %s113
      %s130 = sphi 0, %s114
      %s136 = sphi 0, %s138
      %s139 = sphi 0, %s136
      %s140 = sphi 0, %s139
      %s156 = sphi 0, %s140
      %s162 = sphi 0, %s164
      %s165 = sphi 0, %s162
      %s166 = sphi 0, %s165
      %s182 = sphi 0, %s166
      %s186 = sphi 0, %s186
      %s188 = sphi 0, %s186
      %s189 = sphi 0, %s188
      %s203 = sphi 0, %s189
      %s209 = sphi 0, %s211
      %s212 = sphi 0, %s209
      %s213 = sphi 0, %s212
      %s229 = sphi 0, %s213
    $region4: #{tpu_custom_call.1} parent=1 // loop_header_branch
      %23 = sbr.rel (%p21) target = $region8
    $region5: #{tpu_custom_call.1} parent=1 // loop_body
      %s25 = ssub.s32 %s20, 1
      %s26 = ssub.s32 %s20, 2
      %s33 = sadd.s32 1, %s28
      %p34 = scmp.ge.s32.totalorder %s33, 1
      %s35 = scalar_select %p34, 0, %s33
      %s36 = sadd.s32 1, %s27
      %s37 = scalar_select %p34, %s36, %s27
      %p38 = scmp.ge.s32.totalorder %s37, 8
      %s39 = scalar_select %p38, 0, %s37
      %s40 = ssub.s32 %s27, %s39
      %p41 = scmp.eq.s32.totalorder %s40, 0
      %s43 = sadd.s32 %s42, 1
      %s44 = scalar_select %p41, %s42, %s43
      %p47 = pneg %p41
      %p48 = scmp.eq.s32.totalorder %s20, 7
      %p49 = por %p47, %p48
      %p50 = scmp.ne.s32.totalorder %s42, %s45
      %p51 = scmp.eq.s32.totalorder %s20, 0
      %p52 = por %p50, %p51
      %p53 = scmp.ne.s32.totalorder %s42, %s45
      %p54 = scmp.eq.s32.totalorder %s25, 7
      %p55 = por %p53, %p54
      %p56 = scmp.ne.s32.totalorder %s45, %s46
      %p57 = scmp.eq.s32.totalorder %s25, 0
      %p58 = por %p56, %p57
      %p59 = scmp.ne.s32.totalorder %s45, %s46
      %p60 = scmp.eq.s32.totalorder %s26, 7
      %p61 = por %p59, %p60
      %p63 = scmp.ne.s32.totalorder %s46, %s62
      %p64 = scmp.eq.s32.totalorder %s26, 0
      %p65 = por %p63, %p64
      %s67 = sadd.s32 %s66, 1
      %p70 = scmp.eq.s32.totalorder %s20, 7
      %p71 = scmp.ne.s32.totalorder %s66, %s68
      %p72 = scmp.eq.s32.totalorder %s20, 0
      %p73 = por %p71, %p72
      %p74 = scmp.ne.s32.totalorder %s66, %s68
      %p75 = scmp.eq.s32.totalorder %s25, 7
      %p76 = por %p74, %p75
      %p77 = scmp.ne.s32.totalorder %s68, %s69
      %p78 = scmp.eq.s32.totalorder %s25, 0
      %p79 = por %p77, %p78
      %p80 = scmp.ne.s32.totalorder %s68, %s69
      %p81 = scmp.eq.s32.totalorder %s26, 7
      %p82 = por %p80, %p81
      %p84 = scmp.ne.s32.totalorder %s69, %s83
      %p85 = scmp.eq.s32.totalorder %s26, 0
      %p86 = por %p84, %p85
      %s88 = sadd.s32 %s87, 1
      %p91 = scmp.eq.s32.totalorder %s20, 7
      %p92 = scmp.ne.s32.totalorder %s87, %s89
      %p93 = scmp.eq.s32.totalorder %s20, 0
      %p94 = por %p92, %p93
      %p95 = scmp.ne.s32.totalorder %s87, %s89
      %p96 = scmp.eq.s32.totalorder %s25, 7
      %p97 = por %p95, %p96
      %p98 = scmp.ne.s32.totalorder %s89, %s90
      %p99 = scmp.eq.s32.totalorder %s25, 0
      %p100 = por %p98, %p99
      %p101 = scmp.ne.s32.totalorder %s89, %s90
      %p102 = scmp.eq.s32.totalorder %s26, 7
      %p103 = por %p101, %p102
      %p105 = scmp.ne.s32.totalorder %s90, %s104
      %p106 = scmp.eq.s32.totalorder %s26, 0
      %p107 = por %p105, %p106
      %s108 = ssub.s32 %s28, %s35
      %p109 = scmp.eq.s32.totalorder %s108, 0
      %s111 = sadd.s32 %s110, 1
      %s112 = scalar_select %p109, %s110, %s111
      %p115 = pneg %p109
      %p116 = scmp.eq.s32.totalorder %s20, 7
      %p117 = por %p115, %p116
      %p118 = scmp.ne.s32.totalorder %s110, %s113
      %p119 = scmp.eq.s32.totalorder %s20, 0
      %p120 = por %p118, %p119
      %p121 = scmp.ne.s32.totalorder %s110, %s113
      %p122 = scmp.eq.s32.totalorder %s25, 7
      %p123 = por %p121, %p122
      %p124 = scmp.ne.s32.totalorder %s113, %s114
      %p125 = scmp.eq.s32.totalorder %s25, 0
      %p126 = por %p124, %p125
      %p127 = scmp.ne.s32.totalorder %s113, %s114
      %p128 = scmp.eq.s32.totalorder %s26, 7
      %p129 = por %p127, %p128
      %p131 = scmp.ne.s32.totalorder %s114, %s130
      %p132 = scmp.eq.s32.totalorder %s26, 0
      %p133 = por %p131, %p132
      %s134 = ssub.s32 %s28, %s35
      %p135 = scmp.eq.s32.totalorder %s134, 0
      %s137 = sadd.s32 %s136, 1
      %s138 = scalar_select %p135, %s136, %s137
      %p141 = pneg %p135
      %p142 = scmp.eq.s32.totalorder %s20, 7
      %p143 = por %p141, %p142
      %p144 = scmp.ne.s32.totalorder %s136, %s139
      %p145 = scmp.eq.s32.totalorder %s20, 0
      %p146 = por %p144, %p145
      %p147 = scmp.ne.s32.totalorder %s136, %s139
      %p148 = scmp.eq.s32.totalorder %s25, 7
      %p149 = por %p147, %p148
      %p150 = scmp.ne.s32.totalorder %s139, %s140
      %p151 = scmp.eq.s32.totalorder %s25, 0
      %p152 = por %p150, %p151
      %p153 = scmp.ne.s32.totalorder %s139, %s140
      %p154 = scmp.eq.s32.totalorder %s26, 7
      %p155 = por %p153, %p154
      %p157 = scmp.ne.s32.totalorder %s140, %s156
      %p158 = scmp.eq.s32.totalorder %s26, 0
      %p159 = por %p157, %p158
      %s160 = ssub.s32 %s28, %s35
      %p161 = scmp.eq.s32.totalorder %s160, 0
      %s163 = sadd.s32 %s162, 1
      %s164 = scalar_select %p161, %s162, %s163
      %p167 = pneg %p161
      %p168 = scmp.eq.s32.totalorder %s20, 7
      %p169 = por %p167, %p168
      %p170 = scmp.ne.s32.totalorder %s162, %s165
      %p171 = scmp.eq.s32.totalorder %s20, 0
      %p172 = por %p170, %p171
      %p173 = scmp.ne.s32.totalorder %s162, %s165
      %p174 = scmp.eq.s32.totalorder %s25, 7
      %p175 = por %p173, %p174
      %p176 = scmp.ne.s32.totalorder %s165, %s166
      %p177 = scmp.eq.s32.totalorder %s25, 0
      %p178 = por %p176, %p177
      %p179 = scmp.ne.s32.totalorder %s165, %s166
      %p180 = scmp.eq.s32.totalorder %s26, 7
      %p181 = por %p179, %p180
      %p183 = scmp.ne.s32.totalorder %s166, %s182
      %p184 = scmp.eq.s32.totalorder %s26, 0
      %p185 = por %p183, %p184
      %s187 = sadd.s32 %s186, 1
      %p190 = scmp.eq.s32.totalorder %s20, 7
      %p191 = scmp.ne.s32.totalorder %s186, %s188
      %p192 = scmp.eq.s32.totalorder %s20, 0
      %p193 = por %p191, %p192
      %p194 = scmp.ne.s32.totalorder %s186, %s188
      %p195 = scmp.eq.s32.totalorder %s25, 7
      %p196 = por %p194, %p195
      %p197 = scmp.ne.s32.totalorder %s188, %s189
      %p198 = scmp.eq.s32.totalorder %s25, 0
      %p199 = por %p197, %p198
      %p200 = scmp.ne.s32.totalorder %s188, %s189
      %p201 = scmp.eq.s32.totalorder %s26, 7
      %p202 = por %p200, %p201
      %p204 = scmp.ne.s32.totalorder %s189, %s203
      %p205 = scmp.eq.s32.totalorder %s26, 0
      %p206 = por %p204, %p205
      %s207 = ssub.s32 %s27, %s39
      %p208 = scmp.eq.s32.totalorder %s207, 0
      %s210 = sadd.s32 %s209, 1
      %s211 = scalar_select %p208, %s209, %s210
      %p214 = pneg %p208
      %p215 = scmp.eq.s32.totalorder %s20, 7
      %p216 = por %p214, %p215
      %p217 = scmp.ne.s32.totalorder %s209, %s212
      %p218 = scmp.eq.s32.totalorder %s20, 0
      %p219 = por %p217, %p218
      %p220 = scmp.ne.s32.totalorder %s209, %s212
      %p221 = scmp.eq.s32.totalorder %s25, 7
      %p222 = por %p220, %p221
      %p223 = scmp.ne.s32.totalorder %s212, %s213
      %p224 = scmp.eq.s32.totalorder %s25, 0
      %p225 = por %p223, %p224
      %p226 = scmp.ne.s32.totalorder %s212, %s213
      %p227 = scmp.eq.s32.totalorder %s26, 7
      %p228 = por %p226, %p227
      %p230 = scmp.ne.s32.totalorder %s213, %s229
      %p231 = scmp.eq.s32.totalorder %s26, 0
      %p232 = por %p230, %p231
      %p233 = scmp.le.s32.totalorder 1, %s20
      %p234 = scmp.lt.s32.totalorder %s20, 9
      %p235 = pnand %p233, %p234
      %p236 = pneg %p235
      // Predicated region
      $region9: #{tpu_custom_call.1} parent=5 // pred_check
        _
      $region10: #{tpu_custom_call.1} parent=5 // pred_check_branch
        %238 = sbr.rel (%p235) target = $region12
      $region11: #{tpu_custom_call.1} parent=5 // pred_region
        %s239 = ssub.s32 %s20, 1
        // Predicated region
        $region13: #{tpu_custom_call.1} parent=11 // pred_check
          %p240 = pneg %p79
        $region14: #{tpu_custom_call.1} parent=11 // pred_check_branch
          %242 = sbr.rel (%p240) target = $region16
        $region15: #{tpu_custom_call.1} parent=11 // pred_region
          _
        $region16: #{tpu_custom_call.1} parent=11 // pred_fallthru
          _
        // Predicated region
        $region17: #{tpu_custom_call.1} parent=11 // pred_check
          %p243 = pneg %p100
        $region18: #{tpu_custom_call.1} parent=11 // pred_check_branch
          %245 = sbr.rel (%p243) target = $region20
        $region19: #{tpu_custom_call.1} parent=11 // pred_region
          _
        $region20: #{tpu_custom_call.1} parent=11 // pred_fallthru
          _
        // Predicated region
        $region21: #{tpu_custom_call.1} parent=11 // pred_check
          %p246 = pneg %p126
        $region22: #{tpu_custom_call.1} parent=11 // pred_check_branch
          %248 = sbr.rel (%p246) target = $region24
        $region23: #{tpu_custom_call.1} parent=11 // pred_region
          %p249 = scmp.lt.s32.totalorder %s30, 0
          %s250 = scalar_select %p249, %s30, 0
          %s251 = smul.addr %s250, 4
          %s252 = scalar_lea.vmem %s3, %s251
        $region24: #{tpu_custom_call.1} parent=11 // pred_fallthru
          _
        // Predicated region
        $region25: #{tpu_custom_call.1} parent=11 // pred_check
          %p253 = pneg %p152
        $region26: #{tpu_custom_call.1} parent=11 // pred_check_branch
          %255 = sbr.rel (%p253) target = $region28
        $region27: #{tpu_custom_call.1} parent=11 // pred_region
          %p256 = scmp.lt.s32.totalorder %s30, 0
          %s257 = scalar_select %p256, %s30, 0
          %s258 = scalar_lea.vmem %s4, %s257
        $region28: #{tpu_custom_call.1} parent=11 // pred_fallthru
          _
        // Predicated region
        $region29: #{tpu_custom_call.1} parent=11 // pred_check
          %p259 = pneg %p178
        $region30: #{tpu_custom_call.1} parent=11 // pred_check_branch
          %261 = sbr.rel (%p259) target = $region32
        $region31: #{tpu_custom_call.1} parent=11 // pred_region
          %s262 = smul.u32 16, %s30
          %264 = vsyncadd [#allocation8], 0
          %s265 = smul.addr %s262, 4
          %s266 = scalar_lea.hbm %s5, %s265
          %s267 = sshll.u32 %s266, 4
          %s268 = int_to_ptr.hbm [resolvable:$true] %s267
          %s269 = sshll.u32 [#allocation7], 4
          %s270 = int_to_ptr.vmem [resolvable:$true] %s269
          %275 = dma.hbm_to_vmem [thread:$0]  %s268, 1024, %s270, [#allocation8], 64, 64, 4
        $region32: #{tpu_custom_call.1} parent=11 // pred_fallthru
          _
        // Predicated region
        $region33: #{tpu_custom_call.1} parent=11 // pred_check
          %p276 = pneg %p199
        $region34: #{tpu_custom_call.1} parent=11 // pred_check_branch
          %278 = sbr.rel (%p276) target = $region36
        $region35: #{tpu_custom_call.1} parent=11 // pred_region
          _
        $region36: #{tpu_custom_call.1} parent=11 // pred_fallthru
          _
      $region12: #{tpu_custom_call.1} parent=5 // pred_fallthru
        _
      %p279 = scmp.lt.s32.totalorder %s20, 8
      // Predicated region
      $region37: #{tpu_custom_call.1} parent=5 // pred_check
        %p280 = pneg %p279
      $region38: #{tpu_custom_call.1} parent=5 // pred_check_branch
        %282 = sbr.rel (%p280) target = $region40
      $region39: #{tpu_custom_call.1} parent=5 // pred_region
        // Predicated region
        $region41: #{tpu_custom_call.1} parent=39 // pred_check
          %p283 = pneg %p52
        $region42: #{tpu_custom_call.1} parent=39 // pred_check_branch
          %285 = sbr.rel (%p283) target = $region44
        $region43: #{tpu_custom_call.1} parent=39 // pred_region
          %s286 = sand.u32 %s42, 1
          %s287 = scalar_lea.sflag [#allocation5], %s286
          %s288 = sand.u32 %s42, 1
          %s289 = smul.addr %s288, 64
          %s290 = scalar_lea.vmem [#allocation4], %s289
          %s291 = smul.u32 16, %s27
          %293 = vsyncadd %s287, 0
          %s294 = smul.addr %s291, 4
          %s295 = scalar_lea.hbm %s0, %s294
          %s296 = sshll.u32 %s295, 4
          %s297 = int_to_ptr.hbm [resolvable:$true] %s296
          %s298 = sshll.u32 %s290, 4
          %s299 = int_to_ptr.vmem [resolvable:$true] %s298
          %304 = dma.hbm_to_vmem [thread:$0]  %s297, 1024, %s299, %s287, 64, 64, 4
        $region44: #{tpu_custom_call.1} parent=39 // pred_fallthru
          _
      $region40: #{tpu_custom_call.1} parent=5 // pred_fallthru
        _
      %p305 = scmp.le.s32.totalorder 1, %s20
      %p306 = scmp.lt.s32.totalorder %s20, 9
      %p307 = pnand %p305, %p306
      %p308 = pneg %p307
      // Predicated region
      $region45: #{tpu_custom_call.1} parent=5 // pred_check
        _
      $region46: #{tpu_custom_call.1} parent=5 // pred_check_branch
        %310 = sbr.rel (%p307) target = $region48
      $region47: #{tpu_custom_call.1} parent=5 // pred_region
        %s311 = ssub.s32 %s20, 1
        %s312 = sand.u32 %s45, 1
        %s313 = scalar_lea.sflag [#allocation5], %s312
        %s314 = sand.u32 %s45, 1
        %s315 = smul.addr %s314, 64
        %s316 = scalar_lea.vmem [#allocation4], %s315
        // Predicated region
        $region49: #{tpu_custom_call.1} parent=47 // pred_check
          %p317 = pneg %p58
        $region50: #{tpu_custom_call.1} parent=47 // pred_check_branch
          %319 = sbr.rel (%p317) target = $region52
        $region51: #{tpu_custom_call.1} parent=47 // pred_region
          %321 = dma.done %s313, 1024
        $region52: #{tpu_custom_call.1} parent=47 // pred_fallthru
          _
        // Predicated region
        $region53: #{tpu_custom_call.1} parent=47 // pred_check
          %p322 = pneg %p178
        $region54: #{tpu_custom_call.1} parent=47 // pred_check_branch
          %324 = sbr.rel (%p322) target = $region56
        $region55: #{tpu_custom_call.1} parent=47 // pred_region
          %326 = dma.done [#allocation8], 1024
        $region56: #{tpu_custom_call.1} parent=47 // pred_fallthru
          _
        %s327 = sand.u32 %s45, 1
        %s328 = scalar_lea.sflag [#allocation5], %s327
        %s329 = sand.u32 %s45, 1
        %s330 = smul.addr %s329, 64
        %s331 = scalar_lea.vmem [#allocation4], %s330
        %p332 = pneg %p58
        %p333 = pneg %p55
        %p334 = pneg %p79
        %p335 = pneg %p76
        %p336 = pneg %p100
        %p337 = pneg %p97
        %p338 = scmp.lt.s32.totalorder %s30, 0
        %s339 = scalar_select %p338, %s30, 0
        %s340 = smul.addr %s339, 4
        %s341 = scalar_lea.vmem %s3, %s340
        %p342 = pneg %p126
        %p343 = pneg %p123
        %p344 = scmp.lt.s32.totalorder %s30, 0
        %s345 = scalar_select %p344, %s30, 0
        %s346 = scalar_lea.vmem %s4, %s345
        %p347 = pneg %p152
        %p348 = pneg %p149
        %p349 = pneg %p178
        %p350 = pneg %p175
        %p351 = pneg %p199
        %p352 = pneg %p196
        %p353 = pneg %p225
        %p354 = pneg %p222
        %s355 = sand.u32 %s212, 1
        %s356 = scalar_lea.sflag [#allocation6], %s355
        %s357 = sand.u32 %s212, 1
        %s358 = smul.addr %s357, 128
        %s359 = scalar_lea.vmem [#allocation9], %s358
        %s360 = smul.u32 16, %s29
        %p361 = scmp.lt.s32.totalorder %s30, 0
        %s362 = scalar_select %p361, %s30, 0
        %s363 = smul.addr %s362, 4
        %s364 = scalar_lea.vmem %s3, %s363
        %p365 = scmp.lt.s32.totalorder %s30, 0
        %s366 = scalar_select %p365, %s30, 0
        %s367 = scalar_lea.vmem %s4, %s366
        %s368 = smul.u32 16, %s30
        %s369 = smul.u32 16, %s29
        %p371 = scmp.eq.s32.totalorder %s30, 0
        // Predicated region
        $region57: #{tpu_custom_call.1} parent=47 // pred_check
          %p372 = pneg %p371
        $region58: #{tpu_custom_call.1} parent=47 // pred_check_branch
          %374 = sbr.rel (%p372) target = $region60
        $region59: #{tpu_custom_call.1} parent=47 // pred_region
          %v375 = vld [vmem:[%s316] sm:$0xf]
          %v376 = vld [vmem:[%s316 + $0x4] sm:$0xf]
          %v377 = vld [vmem:[%s316 + $0x8] sm:$0xf]
          %v378 = vld [vmem:[%s316 + $0xc] sm:$0xf]
          %v379 = vld [vmem:[%s316 + $0x10] sm:$0xf]
          %v380 = vld [vmem:[%s316 + $0x14] sm:$0xf]
          %v381 = vld [vmem:[%s316 + $0x18] sm:$0xf]
          %v382 = vld [vmem:[%s316 + $0x1c] sm:$0xf]
          %v383 = vld [vmem:[%s316 + $0x20] sm:$0xf]
          %v384 = vld [vmem:[%s316 + $0x24] sm:$0xf]
          %v385 = vld [vmem:[%s316 + $0x28] sm:$0xf]
          %v386 = vld [vmem:[%s316 + $0x2c] sm:$0xf]
          %v387 = vld [vmem:[%s316 + $0x30] sm:$0xf]
          %v388 = vld [vmem:[%s316 + $0x34] sm:$0xf]
          %v389 = vld [vmem:[%s316 + $0x38] sm:$0xf]
          %v390 = vld [vmem:[%s316 + $0x3c] sm:$0xf]
          %v391 = vunpack.c.l.bf16 %v375
          %v392 = vunpack.c.l.bf16 %v376
          %v393 = vunpack.c.l.bf16 %v377
          %v394 = vunpack.c.l.bf16 %v378
          %v395 = vunpack.c.l.bf16 %v379
          %v396 = vunpack.c.l.bf16 %v380
          %v397 = vunpack.c.l.bf16 %v381
          %v398 = vunpack.c.l.bf16 %v382
          %v399 = vunpack.c.l.bf16 %v383
          %v400 = vunpack.c.l.bf16 %v384
          %v401 = vunpack.c.l.bf16 %v385
          %v402 = vunpack.c.l.bf16 %v386
          %v403 = vunpack.c.l.bf16 %v387
          %v404 = vunpack.c.l.bf16 %v388
          %v405 = vunpack.c.l.bf16 %v389
          %v406 = vunpack.c.l.bf16 %v390
          %v407 = vld [vmem:[%s1] sm:$0xf]
          %v408 = vld [vmem:[%s1 + $0x4] sm:$0xf]
          %v409 = vld [vmem:[%s1 + $0x8] sm:$0xf]
          %v410 = vld [vmem:[%s1 + $0xc] sm:$0xf]
          %v411 = vld [vmem:[%s1 + $0x10] sm:$0xf]
          %v412 = vld [vmem:[%s1 + $0x14] sm:$0xf]
          %v413 = vld [vmem:[%s1 + $0x18] sm:$0xf]
          %v414 = vld [vmem:[%s1 + $0x1c] sm:$0xf]
          %v415 = vld [vmem:[%s1 + $0x20] sm:$0xf]
          %v416 = vld [vmem:[%s1 + $0x24] sm:$0xf]
          %v417 = vld [vmem:[%s1 + $0x28] sm:$0xf]
          %v418 = vld [vmem:[%s1 + $0x2c] sm:$0xf]
          %v419 = vld [vmem:[%s1 + $0x30] sm:$0xf]
          %v420 = vld [vmem:[%s1 + $0x34] sm:$0xf]
          %v421 = vld [vmem:[%s1 + $0x38] sm:$0xf]
          %v422 = vld [vmem:[%s1 + $0x3c] sm:$0xf]
          %v439 = vunpack.c.l.b16 %v375
          %v440 = vunpack.c.l.b16 %v376
          %v441 = vunpack.c.l.b16 %v377
          %v442 = vunpack.c.l.b16 %v378
          %v443 = vunpack.c.l.b16 %v379
          %v444 = vunpack.c.l.b16 %v380
          %v445 = vunpack.c.l.b16 %v381
          %v446 = vunpack.c.l.b16 %v382
          %v447 = vunpack.c.l.b16 %v383
          %v448 = vunpack.c.l.b16 %v384
          %v449 = vunpack.c.l.b16 %v385
          %v450 = vunpack.c.l.b16 %v386
          %v451 = vunpack.c.l.b16 %v387
          %v452 = vunpack.c.l.b16 %v388
          %v453 = vunpack.c.l.b16 %v389
          %v454 = vunpack.c.l.b16 %v390
          %v455 = vpack.c.b16 %v440, %v439
          %v456 = vpack.c.b16 %v442, %v441
          %v457 = vpack.c.b16 %v444, %v443
          %v458 = vpack.c.b16 %v446, %v445
          %v459 = vpack.c.b16 %v448, %v447
          %v460 = vpack.c.b16 %v450, %v449
          %v461 = vpack.c.b16 %v452, %v451
          %v462 = vpack.c.b16 %v454, %v453
          %v487 = vunpack.c.l.b16 %v407
          %v488 = vunpack.c.l.b16 %v408
          %v489 = vunpack.c.l.b16 %v409
          %v490 = vunpack.c.l.b16 %v410
          %v491 = vunpack.c.l.b16 %v411
          %v492 = vunpack.c.l.b16 %v412
          %v493 = vunpack.c.l.b16 %v413
          %v494 = vunpack.c.l.b16 %v414
          %v495 = vunpack.c.l.b16 %v415
          %v496 = vunpack.c.l.b16 %v416
          %v497 = vunpack.c.l.b16 %v417
          %v498 = vunpack.c.l.b16 %v418
          %v499 = vunpack.c.l.b16 %v419
          %v500 = vunpack.c.l.b16 %v420
          %v501 = vunpack.c.l.b16 %v421
          %v502 = vunpack.c.l.b16 %v422
          %v503 = vpack.c.b16 %v488, %v487
          %v504 = vpack.c.b16 %v490, %v489
          %v505 = vpack.c.b16 %v492, %v491
          %v506 = vpack.c.b16 %v494, %v493
          %v507 = vpack.c.b16 %v496, %v495
          %v508 = vpack.c.b16 %v498, %v497
          %v509 = vpack.c.b16 %v500, %v499
          %v510 = vpack.c.b16 %v502, %v501
          %519 = vmatpush.bf16.msra.mxu0 %v510
          %520 = vmatpush.bf16.msra.mxu0 %v509
          %521 = vmatpush.bf16.msra.mxu0 %v508
          %522 = vmatpush.bf16.msra.mxu0 %v507
          %523 = vmatpush.bf16.msra.mxu0 %v506
          %524 = vmatpush.bf16.msra.mxu0 %v505
          %525 = vmatpush.bf16.msra.mxu0 %v504
          %526 = vmatpush.bf16.msra.mxu0 %v503
          %527 = vmatmul.bf16.gmra.mxu0 %v455
          %v528 = vpop.f32.mrf.mxu0
          %v529 = vadd.f32 0.0, %v528
          %v530 = vpop.f32.mrf.mxu0
          %v531 = vadd.f32 0.0, %v530
          %532 = vmatmul.bf16.gmra.mxu0 %v456
          %v533 = vpop.f32.mrf.mxu0
          %v534 = vadd.f32 0.0, %v533
          %v535 = vpop.f32.mrf.mxu0
          %v536 = vadd.f32 0.0, %v535
          %537 = vmatmul.bf16.gmra.mxu0 %v457
          %v538 = vpop.f32.mrf.mxu0
          %v539 = vadd.f32 0.0, %v538
          %v540 = vpop.f32.mrf.mxu0
          %v541 = vadd.f32 0.0, %v540
          %542 = vmatmul.bf16.gmra.mxu0 %v458
          %v543 = vpop.f32.mrf.mxu0
          %v544 = vadd.f32 0.0, %v543
          %v545 = vpop.f32.mrf.mxu0
          %v546 = vadd.f32 0.0, %v545
          %547 = vmatmul.bf16.gmra.mxu0 %v459
          %v548 = vpop.f32.mrf.mxu0
          %v549 = vadd.f32 0.0, %v548
          %v550 = vpop.f32.mrf.mxu0
          %v551 = vadd.f32 0.0, %v550
          %552 = vmatmul.bf16.gmra.mxu0 %v460
          %v553 = vpop.f32.mrf.mxu0
          %v554 = vadd.f32 0.0, %v553
          %v555 = vpop.f32.mrf.mxu0
          %v556 = vadd.f32 0.0, %v555
          %557 = vmatmul.bf16.gmra.mxu0 %v461
          %v558 = vpop.f32.mrf.mxu0
          %v559 = vadd.f32 0.0, %v558
          %v560 = vpop.f32.mrf.mxu0
          %v561 = vadd.f32 0.0, %v560
          %562 = vmatmul.bf16.gmra.mxu0 %v462
          %v563 = vpop.f32.mrf.mxu0
          %v564 = vadd.f32 0.0, %v563
          %v565 = vpop.f32.mrf.mxu0
          %v566 = vadd.f32 0.0, %v565
          %567 = vdwg.mxu0
          %v568 = vmul.f32 %v391, %v391
          %v569 = vmul.f32 %v392, %v392
          %v570 = vmul.f32 %v393, %v393
          %v571 = vmul.f32 %v394, %v394
          %v572 = vmul.f32 %v395, %v395
          %v573 = vmul.f32 %v396, %v396
          %v574 = vmul.f32 %v397, %v397
          %v575 = vmul.f32 %v398, %v398
          %v576 = vmul.f32 %v399, %v399
          %v577 = vmul.f32 %v400, %v400
          %v578 = vmul.f32 %v401, %v401
          %v579 = vmul.f32 %v402, %v402
          %v580 = vmul.f32 %v403, %v403
          %v581 = vmul.f32 %v404, %v404
          %v582 = vmul.f32 %v405, %v405
          %v583 = vmul.f32 %v406, %v406
          %v584 = vpack.c.bf16 %v569, %v568
          %v585 = vpack.c.bf16 %v571, %v570
          %v586 = vpack.c.bf16 %v573, %v572
          %v587 = vpack.c.bf16 %v575, %v574
          %v588 = vpack.c.bf16 %v577, %v576
          %v589 = vpack.c.bf16 %v579, %v578
          %v590 = vpack.c.bf16 %v581, %v580
          %v591 = vpack.c.bf16 %v583, %v582
          %592 = vmatpush.bf16.msra.mxu0 %v510
          %593 = vmatpush.bf16.msra.mxu0 %v509
          %594 = vmatpush.bf16.msra.mxu0 %v508
          %595 = vmatpush.bf16.msra.mxu0 %v507
          %596 = vmatpush.bf16.msra.mxu0 %v506
          %597 = vmatpush.bf16.msra.mxu0 %v505
          %598 = vmatpush.bf16.msra.mxu0 %v504
          %599 = vmatpush.bf16.msra.mxu0 %v503
          %600 = vmatmul.bf16.gmra.mxu0 %v584
          %v601 = vpop.f32.mrf.mxu0
          %v602 = vadd.f32 0.0, %v601
          %v603 = vpop.f32.mrf.mxu0
          %v604 = vadd.f32 0.0, %v603
          %605 = vmatmul.bf16.gmra.mxu0 %v585
          %v606 = vpop.f32.mrf.mxu0
          %v607 = vadd.f32 0.0, %v606
          %v608 = vpop.f32.mrf.mxu0
          %v609 = vadd.f32 0.0, %v608
          %610 = vmatmul.bf16.gmra.mxu0 %v586
          %v611 = vpop.f32.mrf.mxu0
          %v612 = vadd.f32 0.0, %v611
          %v613 = vpop.f32.mrf.mxu0
          %v614 = vadd.f32 0.0, %v613
          %615 = vmatmul.bf16.gmra.mxu0 %v587
          %v616 = vpop.f32.mrf.mxu0
          %v617 = vadd.f32 0.0, %v616
          %v618 = vpop.f32.mrf.mxu0
          %v619 = vadd.f32 0.0, %v618
          %620 = vmatmul.bf16.gmra.mxu0 %v588
          %v621 = vpop.f32.mrf.mxu0
          %v622 = vadd.f32 0.0, %v621
          %v623 = vpop.f32.mrf.mxu0
          %v624 = vadd.f32 0.0, %v623
          %625 = vmatmul.bf16.gmra.mxu0 %v589
          %v626 = vpop.f32.mrf.mxu0
          %v627 = vadd.f32 0.0, %v626
          %v628 = vpop.f32.mrf.mxu0
          %v629 = vadd.f32 0.0, %v628
          %630 = vmatmul.bf16.gmra.mxu0 %v590
          %v631 = vpop.f32.mrf.mxu0
          %v632 = vadd.f32 0.0, %v631
          %v633 = vpop.f32.mrf.mxu0
          %v634 = vadd.f32 0.0, %v633
          %635 = vmatmul.bf16.gmra.mxu0 %v591
          %v636 = vpop.f32.mrf.mxu0
          %v637 = vadd.f32 0.0, %v636
          %v638 = vpop.f32.mrf.mxu0
          %v639 = vadd.f32 0.0, %v638
          %640 = vdwg.mxu0
          %v641 = vmul.f32 %v529, %v529
          %v642 = vmul.f32 %v531, %v531
          %v643 = vmul.f32 %v534, %v534
          %v644 = vmul.f32 %v536, %v536
          %v645 = vmul.f32 %v539, %v539
          %v646 = vmul.f32 %v541, %v541
          %v647 = vmul.f32 %v544, %v544
          %v648 = vmul.f32 %v546, %v546
          %v649 = vmul.f32 %v549, %v549
          %v650 = vmul.f32 %v551, %v551
          %v651 = vmul.f32 %v554, %v554
          %v652 = vmul.f32 %v556, %v556
          %v653 = vmul.f32 %v559, %v559
          %v654 = vmul.f32 %v561, %v561
          %v655 = vmul.f32 %v564, %v564
          %v656 = vmul.f32 %v566, %v566
          %v657 = vsub.f32 %v602, %v641
          %v658 = vsub.f32 %v604, %v642
          %v659 = vsub.f32 %v607, %v643
          %v660 = vsub.f32 %v609, %v644
          %v661 = vsub.f32 %v612, %v645
          %v662 = vsub.f32 %v614, %v646
          %v663 = vsub.f32 %v617, %v647
          %v664 = vsub.f32 %v619, %v648
          %v665 = vsub.f32 %v622, %v649
          %v666 = vsub.f32 %v624, %v650
          %v667 = vsub.f32 %v627, %v651
          %v668 = vsub.f32 %v629, %v652
          %v669 = vsub.f32 %v632, %v653
          %v670 = vsub.f32 %v634, %v654
          %v671 = vsub.f32 %v637, %v655
          %v672 = vsub.f32 %v639, %v656
          %v673 = vmax.f32 %v657, 0.0
          %v674 = vmax.f32 %v658, 0.0
          %v675 = vmax.f32 %v659, 0.0
          %v676 = vmax.f32 %v660, 0.0
          %v677 = vmax.f32 %v661, 0.0
          %v678 = vmax.f32 %v662, 0.0
          %v679 = vmax.f32 %v663, 0.0
          %v680 = vmax.f32 %v664, 0.0
          %v681 = vmax.f32 %v665, 0.0
          %v682 = vmax.f32 %v666, 0.0
          %v683 = vmax.f32 %v667, 0.0
          %v684 = vmax.f32 %v668, 0.0
          %v685 = vmax.f32 %v669, 0.0
          %v686 = vmax.f32 %v670, 0.0
          %v687 = vmax.f32 %v671, 0.0
          %v688 = vmax.f32 %v672, 0.0
          %v689 = vadd.f32 %v673, 1e-06
          %v690 = vadd.f32 %v674, 1e-06
          %v691 = vadd.f32 %v675, 1e-06
          %v692 = vadd.f32 %v676, 1e-06
          %v693 = vadd.f32 %v677, 1e-06
          %v694 = vadd.f32 %v678, 1e-06
          %v695 = vadd.f32 %v679, 1e-06
          %v696 = vadd.f32 %v680, 1e-06
          %v697 = vadd.f32 %v681, 1e-06
          %v698 = vadd.f32 %v682, 1e-06
          %v699 = vadd.f32 %v683, 1e-06
          %v700 = vadd.f32 %v684, 1e-06
          %v701 = vadd.f32 %v685, 1e-06
          %v702 = vadd.f32 %v686, 1e-06
          %v703 = vadd.f32 %v687, 1e-06
          %v704 = vadd.f32 %v688, 1e-06
          %v705 = vrsqrt.pop %v689
          %v706 = vmul.f32 %v705, %v689
          %v707 = vmul.f32 %v706, %v705
          %v708 = vmul.f32 0.5, %v707
          %v709 = vsub.f32 1.5, %v708
          %v710 = vmul.f32 %v705, %v709
          %vm711 = vweird.f32 %v689
          %vm712 = vweird.f32 %v705
          %vm713 = vmor %vm711, %vm712
          %v714 = vsel %vm713, %v705, %v710
          %v715 = vrsqrt.pop %v690
          %v716 = vmul.f32 %v715, %v690
          %v717 = vmul.f32 %v716, %v715
          %v718 = vmul.f32 0.5, %v717
          %v719 = vsub.f32 1.5, %v718
          %v720 = vmul.f32 %v715, %v719
          %vm721 = vweird.f32 %v690
          %vm722 = vweird.f32 %v715
          %vm723 = vmor %vm721, %vm722
          %v724 = vsel %vm723, %v715, %v720
          %v725 = vrsqrt.pop %v691
          %v726 = vmul.f32 %v725, %v691
          %v727 = vmul.f32 %v726, %v725
          %v728 = vmul.f32 0.5, %v727
          %v729 = vsub.f32 1.5, %v728
          %v730 = vmul.f32 %v725, %v729
          %vm731 = vweird.f32 %v691
          %vm732 = vweird.f32 %v725
          %vm733 = vmor %vm731, %vm732
          %v734 = vsel %vm733, %v725, %v730
          %v735 = vrsqrt.pop %v692
          %v736 = vmul.f32 %v735, %v692
          %v737 = vmul.f32 %v736, %v735
          %v738 = vmul.f32 0.5, %v737
          %v739 = vsub.f32 1.5, %v738
          %v740 = vmul.f32 %v735, %v739
          %vm741 = vweird.f32 %v692
          %vm742 = vweird.f32 %v735
          %vm743 = vmor %vm741, %vm742
          %v744 = vsel %vm743, %v735, %v740
          %v745 = vrsqrt.pop %v693
          %v746 = vmul.f32 %v745, %v693
          %v747 = vmul.f32 %v746, %v745
          %v748 = vmul.f32 0.5, %v747
          %v749 = vsub.f32 1.5, %v748
          %v750 = vmul.f32 %v745, %v749
          %vm751 = vweird.f32 %v693
          %vm752 = vweird.f32 %v745
          %vm753 = vmor %vm751, %vm752
          %v754 = vsel %vm753, %v745, %v750
          %v755 = vrsqrt.pop %v694
          %v756 = vmul.f32 %v755, %v694
          %v757 = vmul.f32 %v756, %v755
          %v758 = vmul.f32 0.5, %v757
          %v759 = vsub.f32 1.5, %v758
          %v760 = vmul.f32 %v755, %v759
          %vm761 = vweird.f32 %v694
          %vm762 = vweird.f32 %v755
          %vm763 = vmor %vm761, %vm762
          %v764 = vsel %vm763, %v755, %v760
          %v765 = vrsqrt.pop %v695
          %v766 = vmul.f32 %v765, %v695
          %v767 = vmul.f32 %v766, %v765
          %v768 = vmul.f32 0.5, %v767
          %v769 = vsub.f32 1.5, %v768
          %v770 = vmul.f32 %v765, %v769
          %vm771 = vweird.f32 %v695
          %vm772 = vweird.f32 %v765
          %vm773 = vmor %vm771, %vm772
          %v774 = vsel %vm773, %v765, %v770
          %v775 = vrsqrt.pop %v696
          %v776 = vmul.f32 %v775, %v696
          %v777 = vmul.f32 %v776, %v775
          %v778 = vmul.f32 0.5, %v777
          %v779 = vsub.f32 1.5, %v778
          %v780 = vmul.f32 %v775, %v779
          %vm781 = vweird.f32 %v696
          %vm782 = vweird.f32 %v775
          %vm783 = vmor %vm781, %vm782
          %v784 = vsel %vm783, %v775, %v780
          %v785 = vrsqrt.pop %v697
          %v786 = vmul.f32 %v785, %v697
          %v787 = vmul.f32 %v786, %v785
          %v788 = vmul.f32 0.5, %v787
          %v789 = vsub.f32 1.5, %v788
          %v790 = vmul.f32 %v785, %v789
          %vm791 = vweird.f32 %v697
          %vm792 = vweird.f32 %v785
          %vm793 = vmor %vm791, %vm792
          %v794 = vsel %vm793, %v785, %v790
          %v795 = vrsqrt.pop %v698
          %v796 = vmul.f32 %v795, %v698
          %v797 = vmul.f32 %v796, %v795
          %v798 = vmul.f32 0.5, %v797
          %v799 = vsub.f32 1.5, %v798
          %v800 = vmul.f32 %v795, %v799
          %vm801 = vweird.f32 %v698
          %vm802 = vweird.f32 %v795
          %vm803 = vmor %vm801, %vm802
          %v804 = vsel %vm803, %v795, %v800
          %v805 = vrsqrt.pop %v699
          %v806 = vmul.f32 %v805, %v699
          %v807 = vmul.f32 %v806, %v805
          %v808 = vmul.f32 0.5, %v807
          %v809 = vsub.f32 1.5, %v808
          %v810 = vmul.f32 %v805, %v809
          %vm811 = vweird.f32 %v699
          %vm812 = vweird.f32 %v805
          %vm813 = vmor %vm811, %vm812
          %v814 = vsel %vm813, %v805, %v810
          %v815 = vrsqrt.pop %v700
          %v816 = vmul.f32 %v815, %v700
          %v817 = vmul.f32 %v816, %v815
          %v818 = vmul.f32 0.5, %v817
          %v819 = vsub.f32 1.5, %v818
          %v820 = vmul.f32 %v815, %v819
          %vm821 = vweird.f32 %v700
          %vm822 = vweird.f32 %v815
          %vm823 = vmor %vm821, %vm822
          %v824 = vsel %vm823, %v815, %v820
          %v825 = vrsqrt.pop %v701
          %v826 = vmul.f32 %v825, %v701
          %v827 = vmul.f32 %v826, %v825
          %v828 = vmul.f32 0.5, %v827
          %v829 = vsub.f32 1.5, %v828
          %v830 = vmul.f32 %v825, %v829
          %vm831 = vweird.f32 %v701
          %vm832 = vweird.f32 %v825
          %vm833 = vmor %vm831, %vm832
          %v834 = vsel %vm833, %v825, %v830
          %v835 = vrsqrt.pop %v702
          %v836 = vmul.f32 %v835, %v702
          %v837 = vmul.f32 %v836, %v835
          %v838 = vmul.f32 0.5, %v837
          %v839 = vsub.f32 1.5, %v838
          %v840 = vmul.f32 %v835, %v839
          %vm841 = vweird.f32 %v702
          %vm842 = vweird.f32 %v835
          %vm843 = vmor %vm841, %vm842
          %v844 = vsel %vm843, %v835, %v840
          %v845 = vrsqrt.pop %v703
          %v846 = vmul.f32 %v845, %v703
          %v847 = vmul.f32 %v846, %v845
          %v848 = vmul.f32 0.5, %v847
          %v849 = vsub.f32 1.5, %v848
          %v850 = vmul.f32 %v845, %v849
          %vm851 = vweird.f32 %v703
          %vm852 = vweird.f32 %v845
          %vm853 = vmor %vm851, %vm852
          %v854 = vsel %vm853, %v845, %v850
          %v855 = vrsqrt.pop %v704
          %v856 = vmul.f32 %v855, %v704
          %v857 = vmul.f32 %v856, %v855
          %v858 = vmul.f32 0.5, %v857
          %v859 = vsub.f32 1.5, %v858
          %v860 = vmul.f32 %v855, %v859
          %vm861 = vweird.f32 %v704
          %vm862 = vweird.f32 %v855
          %vm863 = vmor %vm861, %vm862
          %v864 = vsel %vm863, %v855, %v860
          %v865 = vpack.c.bf16 %v724, %v714
          %v866 = vpack.c.bf16 %v744, %v734
          %v867 = vpack.c.bf16 %v764, %v754
          %v868 = vpack.c.bf16 %v784, %v774
          %v869 = vpack.c.bf16 %v804, %v794
          %v870 = vpack.c.bf16 %v824, %v814
          %v871 = vpack.c.bf16 %v844, %v834
          %v872 = vpack.c.bf16 %v864, %v854
          %v873 = vld [vmem:[%s2] sm:$0x3]
          %vm874 = vcmask 31744
          %v876 = vsel %vm874, %v865, 0
          %v879 = vsel %vm874, %v866, 0
          %v882 = vsel %vm874, %v867, 0
          %v885 = vsel %vm874, %v868, 0
          %v888 = vsel %vm874, %v869, 0
          %v891 = vsel %vm874, %v870, 0
          %v894 = vsel %vm874, %v871, 0
          %v897 = vsel %vm874, %v872, 0
          %vm899 = vcmask 1041408
          %v901 = vsel %vm899, %v873, 0
          %903 = vmatpush.bf16.msra.mxu0 0
          %904 = vmatpush.bf16.msra.mxu0 0
          %905 = vmatpush.bf16.msra.mxu0 0
          %906 = vmatpush.bf16.msra.mxu0 0
          %907 = vmatpush.bf16.msra.mxu0 0
          %908 = vmatpush.bf16.msra.mxu0 0
          %909 = vmatpush.bf16.msra.mxu0 0
          %910 = vmatpush.bf16.msra.mxu0 %v901
          %911 = vmatmul.bf16.gmra.mxu0 %v876
          %v912 = vpop.f32.mrf.mxu0
          %v913 = vadd.f32 0.0, %v912
          %v914 = vpop.f32.mrf.mxu0
          %v915 = vadd.f32 0.0, %v914
          %916 = vmatmul.bf16.gmra.mxu0 %v879
          %v917 = vpop.f32.mrf.mxu0
          %v918 = vadd.f32 0.0, %v917
          %v919 = vpop.f32.mrf.mxu0
          %v920 = vadd.f32 0.0, %v919
          %921 = vmatmul.bf16.gmra.mxu0 %v882
          %v922 = vpop.f32.mrf.mxu0
          %v923 = vadd.f32 0.0, %v922
          %v924 = vpop.f32.mrf.mxu0
          %v925 = vadd.f32 0.0, %v924
          %926 = vmatmul.bf16.gmra.mxu0 %v885
          %v927 = vpop.f32.mrf.mxu0
          %v928 = vadd.f32 0.0, %v927
          %v929 = vpop.f32.mrf.mxu0
          %v930 = vadd.f32 0.0, %v929
          %931 = vmatmul.bf16.gmra.mxu0 %v888
          %v932 = vpop.f32.mrf.mxu0
          %v933 = vadd.f32 0.0, %v932
          %v934 = vpop.f32.mrf.mxu0
          %v935 = vadd.f32 0.0, %v934
          %936 = vmatmul.bf16.gmra.mxu0 %v891
          %v937 = vpop.f32.mrf.mxu0
          %v938 = vadd.f32 0.0, %v937
          %v939 = vpop.f32.mrf.mxu0
          %v940 = vadd.f32 0.0, %v939
          %941 = vmatmul.bf16.gmra.mxu0 %v894
          %v942 = vpop.f32.mrf.mxu0
          %v943 = vadd.f32 0.0, %v942
          %v944 = vpop.f32.mrf.mxu0
          %v945 = vadd.f32 0.0, %v944
          %946 = vmatmul.bf16.gmra.mxu0 %v897
          %v947 = vpop.f32.mrf.mxu0
          %v948 = vadd.f32 0.0, %v947
          %v949 = vpop.f32.mrf.mxu0
          %v950 = vadd.f32 0.0, %v949
          %951 = vdwg.mxu0
          %v952 = vsub.f32 0.0, %v529
          %v953 = vsub.f32 0.0, %v531
          %v954 = vsub.f32 0.0, %v534
          %v955 = vsub.f32 0.0, %v536
          %v956 = vsub.f32 0.0, %v539
          %v957 = vsub.f32 0.0, %v541
          %v958 = vsub.f32 0.0, %v544
          %v959 = vsub.f32 0.0, %v546
          %v960 = vsub.f32 0.0, %v549
          %v961 = vsub.f32 0.0, %v551
          %v962 = vsub.f32 0.0, %v554
          %v963 = vsub.f32 0.0, %v556
          %v964 = vsub.f32 0.0, %v559
          %v965 = vsub.f32 0.0, %v561
          %v966 = vsub.f32 0.0, %v564
          %v967 = vsub.f32 0.0, %v566
          %v968 = vmul.f32 %v952, %v714
          %v969 = vmul.f32 %v953, %v724
          %v970 = vmul.f32 %v954, %v734
          %v971 = vmul.f32 %v955, %v744
          %v972 = vmul.f32 %v956, %v754
          %v973 = vmul.f32 %v957, %v764
          %v974 = vmul.f32 %v958, %v774
          %v975 = vmul.f32 %v959, %v784
          %v976 = vmul.f32 %v960, %v794
          %v977 = vmul.f32 %v961, %v804
          %v978 = vmul.f32 %v962, %v814
          %v979 = vmul.f32 %v963, %v824
          %v980 = vmul.f32 %v964, %v834
          %v981 = vmul.f32 %v965, %v844
          %v982 = vmul.f32 %v966, %v854
          %v983 = vmul.f32 %v967, %v864
          %v984 = vpack.c.bf16 %v969, %v968
          %v985 = vpack.c.bf16 %v971, %v970
          %v986 = vpack.c.bf16 %v973, %v972
          %v987 = vpack.c.bf16 %v975, %v974
          %v988 = vpack.c.bf16 %v977, %v976
          %v989 = vpack.c.bf16 %v979, %v978
          %v990 = vpack.c.bf16 %v981, %v980
          %v991 = vpack.c.bf16 %v983, %v982
          %v993 = vsel %vm874, %v984, 0
          %v996 = vsel %vm874, %v985, 0
          %v999 = vsel %vm874, %v986, 0
          %v1002 = vsel %vm874, %v987, 0
          %v1005 = vsel %vm874, %v988, 0
          %v1008 = vsel %vm874, %v989, 0
          %v1011 = vsel %vm874, %v990, 0
          %v1014 = vsel %vm874, %v991, 0
          %1016 = vmatpush.bf16.msra.mxu0 0
          %1017 = vmatpush.bf16.msra.mxu0 0
          %1018 = vmatpush.bf16.msra.mxu0 0
          %1019 = vmatpush.bf16.msra.mxu0 0
          %1020 = vmatpush.bf16.msra.mxu0 0
          %1021 = vmatpush.bf16.msra.mxu0 0
          %1022 = vmatpush.bf16.msra.mxu0 0
          %1023 = vmatpush.bf16.msra.mxu0 %v901
          %1024 = vmatmul.bf16.gmra.mxu0 %v993
          %v1025 = vpop.f32.mrf.mxu0
          %v1026 = vadd.f32 0.0, %v1025
          %v1027 = vpop.f32.mrf.mxu0
          %v1028 = vadd.f32 0.0, %v1027
          %1029 = vmatmul.bf16.gmra.mxu0 %v996
          %v1030 = vpop.f32.mrf.mxu0
          %v1031 = vadd.f32 0.0, %v1030
          %v1032 = vpop.f32.mrf.mxu0
          %v1033 = vadd.f32 0.0, %v1032
          %1034 = vmatmul.bf16.gmra.mxu0 %v999
          %v1035 = vpop.f32.mrf.mxu0
          %v1036 = vadd.f32 0.0, %v1035
          %v1037 = vpop.f32.mrf.mxu0
          %v1038 = vadd.f32 0.0, %v1037
          %1039 = vmatmul.bf16.gmra.mxu0 %v1002
          %v1040 = vpop.f32.mrf.mxu0
          %v1041 = vadd.f32 0.0, %v1040
          %v1042 = vpop.f32.mrf.mxu0
          %v1043 = vadd.f32 0.0, %v1042
          %1044 = vmatmul.bf16.gmra.mxu0 %v1005
          %v1045 = vpop.f32.mrf.mxu0
          %v1046 = vadd.f32 0.0, %v1045
          %v1047 = vpop.f32.mrf.mxu0
          %v1048 = vadd.f32 0.0, %v1047
          %1049 = vmatmul.bf16.gmra.mxu0 %v1008
          %v1050 = vpop.f32.mrf.mxu0
          %v1051 = vadd.f32 0.0, %v1050
          %v1052 = vpop.f32.mrf.mxu0
          %v1053 = vadd.f32 0.0, %v1052
          %1054 = vmatmul.bf16.gmra.mxu0 %v1011
          %v1055 = vpop.f32.mrf.mxu0
          %v1056 = vadd.f32 0.0, %v1055
          %v1057 = vpop.f32.mrf.mxu0
          %v1058 = vadd.f32 0.0, %v1057
          %1059 = vmatmul.bf16.gmra.mxu0 %v1014
          %v1060 = vpop.f32.mrf.mxu0
          %v1061 = vadd.f32 0.0, %v1060
          %v1062 = vpop.f32.mrf.mxu0
          %v1063 = vadd.f32 0.0, %v1062
          %1064 = vdwg.mxu0
          %v1065 = vmul.f32 %v391, %v913
          %v1066 = vmul.f32 %v392, %v915
          %v1067 = vmul.f32 %v393, %v918
          %v1068 = vmul.f32 %v394, %v920
          %v1069 = vmul.f32 %v395, %v923
          %v1070 = vmul.f32 %v396, %v925
          %v1071 = vmul.f32 %v397, %v928
          %v1072 = vmul.f32 %v398, %v930
          %v1073 = vmul.f32 %v399, %v933
          %v1074 = vmul.f32 %v400, %v935
          %v1075 = vmul.f32 %v401, %v938
          %v1076 = vmul.f32 %v402, %v940
          %v1077 = vmul.f32 %v403, %v943
          %v1078 = vmul.f32 %v404, %v945
          %v1079 = vmul.f32 %v405, %v948
          %v1080 = vmul.f32 %v406, %v950
          %v1081 = vadd.f32 %v1065, %v1026
          %v1082 = vadd.f32 %v1066, %v1028
          %v1083 = vadd.f32 %v1067, %v1031
          %v1084 = vadd.f32 %v1068, %v1033
          %v1085 = vadd.f32 %v1069, %v1036
          %v1086 = vadd.f32 %v1070, %v1038
          %v1087 = vadd.f32 %v1071, %v1041
          %v1088 = vadd.f32 %v1072, %v1043
          %v1089 = vadd.f32 %v1073, %v1046
          %v1090 = vadd.f32 %v1074, %v1048
          %v1091 = vadd.f32 %v1075, %v1051
          %v1092 = vadd.f32 %v1076, %v1053
          %v1093 = vadd.f32 %v1077, %v1056
          %v1094 = vadd.f32 %v1078, %v1058
          %v1095 = vadd.f32 %v1079, %v1061
          %v1096 = vadd.f32 %v1080, %v1063
          %v1097 = vpack.c.bf16 %v1081, %v1081
          %v1098 = vpack.c.bf16 %v1082, %v1082
          %v1099 = vpack.c.bf16 %v1083, %v1083
          %v1100 = vpack.c.bf16 %v1084, %v1084
          %v1101 = vpack.c.bf16 %v1085, %v1085
          %v1102 = vpack.c.bf16 %v1086, %v1086
          %v1103 = vpack.c.bf16 %v1087, %v1087
          %v1104 = vpack.c.bf16 %v1088, %v1088
          %v1105 = vpack.c.bf16 %v1089, %v1089
          %v1106 = vpack.c.bf16 %v1090, %v1090
          %v1107 = vpack.c.bf16 %v1091, %v1091
          %v1108 = vpack.c.bf16 %v1092, %v1092
          %v1109 = vpack.c.bf16 %v1093, %v1093
          %v1110 = vpack.c.bf16 %v1094, %v1094
          %v1111 = vpack.c.bf16 %v1095, %v1095
          %v1112 = vpack.c.bf16 %v1096, %v1096
          %1113 = vst [vmem:[#allocation2] sm:$0xf] %v1097
          %1114 = vst [vmem:[#allocation2 + $0x4] sm:$0xf] %v1098
          %1115 = vst [vmem:[#allocation2 + $0x8] sm:$0xf] %v1099
          %1116 = vst [vmem:[#allocation2 + $0xc] sm:$0xf] %v1100
          %1117 = vst [vmem:[#allocation2 + $0x10] sm:$0xf] %v1101
          %1118 = vst [vmem:[#allocation2 + $0x14] sm:$0xf] %v1102
          %1119 = vst [vmem:[#allocation2 + $0x18] sm:$0xf] %v1103
          %1120 = vst [vmem:[#allocation2 + $0x1c] sm:$0xf] %v1104
          %1121 = vst [vmem:[#allocation2 + $0x20] sm:$0xf] %v1105
          %1122 = vst [vmem:[#allocation2 + $0x24] sm:$0xf] %v1106
          %1123 = vst [vmem:[#allocation2 + $0x28] sm:$0xf] %v1107
          %1124 = vst [vmem:[#allocation2 + $0x2c] sm:$0xf] %v1108
          %1125 = vst [vmem:[#allocation2 + $0x30] sm:$0xf] %v1109
          %1126 = vst [vmem:[#allocation2 + $0x34] sm:$0xf] %v1110
          %1127 = vst [vmem:[#allocation2 + $0x38] sm:$0xf] %v1111
          %1128 = vst [vmem:[#allocation2 + $0x3c] sm:$0xf] %v1112
          %1129 = vst [vmem:[#allocation3] sm:$0xff] 0.0
          %1130 = vst [vmem:[#allocation3 + $0x8] sm:$0xff] 0.0
          %1131 = vst [vmem:[#allocation3 + $0x10] sm:$0xff] 0.0
          %1132 = vst [vmem:[#allocation3 + $0x18] sm:$0xff] 0.0
          %1133 = vst [vmem:[#allocation3 + $0x20] sm:$0xff] 0.0
          %1134 = vst [vmem:[#allocation3 + $0x28] sm:$0xff] 0.0
          %1135 = vst [vmem:[#allocation3 + $0x30] sm:$0xff] 0.0
          %1136 = vst [vmem:[#allocation3 + $0x38] sm:$0xff] 0.0
          %1137 = vst [vmem:[#allocation3 + $0x40] sm:$0xff] 0.0
          %1138 = vst [vmem:[#allocation3 + $0x48] sm:$0xff] 0.0
          %1139 = vst [vmem:[#allocation3 + $0x50] sm:$0xff] 0.0
          %1140 = vst [vmem:[#allocation3 + $0x58] sm:$0xff] 0.0
          %1141 = vst [vmem:[#allocation3 + $0x60] sm:$0xff] 0.0
          %1142 = vst [vmem:[#allocation3 + $0x68] sm:$0xff] 0.0
          %1143 = vst [vmem:[#allocation3 + $0x70] sm:$0xff] 0.0
          %1144 = vst [vmem:[#allocation3 + $0x78] sm:$0xff] 0.0
        $region60: #{tpu_custom_call.1} parent=47 // pred_fallthru
          _
        %v1145 = vld [vmem:[#allocation2] sm:$0xf]
        %v1146 = vld [vmem:[#allocation2 + $0x4] sm:$0xf]
        %v1147 = vld [vmem:[#allocation2 + $0x8] sm:$0xf]
        %v1148 = vld [vmem:[#allocation2 + $0xc] sm:$0xf]
        %v1149 = vld [vmem:[#allocation2 + $0x10] sm:$0xf]
        %v1150 = vld [vmem:[#allocation2 + $0x14] sm:$0xf]
        %v1151 = vld [vmem:[#allocation2 + $0x18] sm:$0xf]
        %v1152 = vld [vmem:[#allocation2 + $0x1c] sm:$0xf]
        %v1153 = vld [vmem:[#allocation2 + $0x20] sm:$0xf]
        %v1154 = vld [vmem:[#allocation2 + $0x24] sm:$0xf]
        %v1155 = vld [vmem:[#allocation2 + $0x28] sm:$0xf]
        %v1156 = vld [vmem:[#allocation2 + $0x2c] sm:$0xf]
        %v1157 = vld [vmem:[#allocation2 + $0x30] sm:$0xf]
        %v1158 = vld [vmem:[#allocation2 + $0x34] sm:$0xf]
        %v1159 = vld [vmem:[#allocation2 + $0x38] sm:$0xf]
        %v1160 = vld [vmem:[#allocation2 + $0x3c] sm:$0xf]
        %v1161 = vld [vmem:[%s364] sm:$0xf]
        %v1162 = vld [vmem:[%s364 + $0x4] sm:$0xf]
        %v1163 = vld [vmem:[%s364 + $0x8] sm:$0xf]
        %v1164 = vld [vmem:[%s364 + $0xc] sm:$0xf]
        %v1165 = vld [vmem:[%s364 + $0x10] sm:$0xf]
        %v1166 = vld [vmem:[%s364 + $0x14] sm:$0xf]
        %v1167 = vld [vmem:[%s364 + $0x18] sm:$0xf]
        %v1168 = vld [vmem:[%s364 + $0x1c] sm:$0xf]
        %v1169 = vld [vmem:[%s364 + $0x20] sm:$0xf]
        %v1170 = vld [vmem:[%s364 + $0x24] sm:$0xf]
        %v1171 = vld [vmem:[%s364 + $0x28] sm:$0xf]
        %v1172 = vld [vmem:[%s364 + $0x2c] sm:$0xf]
        %v1173 = vld [vmem:[%s364 + $0x30] sm:$0xf]
        %v1174 = vld [vmem:[%s364 + $0x34] sm:$0xf]
        %v1175 = vld [vmem:[%s364 + $0x38] sm:$0xf]
        %v1176 = vld [vmem:[%s364 + $0x3c] sm:$0xf]
        %v1177 = vld [vmem:[%s367] sm:$0x1]
        %v1179 = vperm.slane %v1177, 0
        %v1197 = vunpack.c.l.b16 %v1145
        %v1198 = vunpack.c.l.b16 %v1146
        %v1199 = vunpack.c.l.b16 %v1147
        %v1200 = vunpack.c.l.b16 %v1148
        %v1201 = vunpack.c.l.b16 %v1149
        %v1202 = vunpack.c.l.b16 %v1150
        %v1203 = vunpack.c.l.b16 %v1151
        %v1204 = vunpack.c.l.b16 %v1152
        %v1205 = vunpack.c.l.b16 %v1153
        %v1206 = vunpack.c.l.b16 %v1154
        %v1207 = vunpack.c.l.b16 %v1155
        %v1208 = vunpack.c.l.b16 %v1156
        %v1209 = vunpack.c.l.b16 %v1157
        %v1210 = vunpack.c.l.b16 %v1158
        %v1211 = vunpack.c.l.b16 %v1159
        %v1212 = vunpack.c.l.b16 %v1160
        %v1213 = vpack.c.b16 %v1198, %v1197
        %v1214 = vpack.c.b16 %v1200, %v1199
        %v1215 = vpack.c.b16 %v1202, %v1201
        %v1216 = vpack.c.b16 %v1204, %v1203
        %v1217 = vpack.c.b16 %v1206, %v1205
        %v1218 = vpack.c.b16 %v1208, %v1207
        %v1219 = vpack.c.b16 %v1210, %v1209
        %v1220 = vpack.c.b16 %v1212, %v1211
        %v1245 = vunpack.c.l.b16 %v1161
        %v1246 = vunpack.c.l.b16 %v1162
        %v1247 = vunpack.c.l.b16 %v1163
        %v1248 = vunpack.c.l.b16 %v1164
        %v1249 = vunpack.c.l.b16 %v1165
        %v1250 = vunpack.c.l.b16 %v1166
        %v1251 = vunpack.c.l.b16 %v1167
        %v1252 = vunpack.c.l.b16 %v1168
        %v1253 = vunpack.c.l.b16 %v1169
        %v1254 = vunpack.c.l.b16 %v1170
        %v1255 = vunpack.c.l.b16 %v1171
        %v1256 = vunpack.c.l.b16 %v1172
        %v1257 = vunpack.c.l.b16 %v1173
        %v1258 = vunpack.c.l.b16 %v1174
        %v1259 = vunpack.c.l.b16 %v1175
        %v1260 = vunpack.c.l.b16 %v1176
        %v1261 = vpack.c.b16 %v1246, %v1245
        %v1262 = vpack.c.b16 %v1248, %v1247
        %v1263 = vpack.c.b16 %v1250, %v1249
        %v1264 = vpack.c.b16 %v1252, %v1251
        %v1265 = vpack.c.b16 %v1254, %v1253
        %v1266 = vpack.c.b16 %v1256, %v1255
        %v1267 = vpack.c.b16 %v1258, %v1257
        %v1268 = vpack.c.b16 %v1260, %v1259
        %1277 = vmatpush.bf16.msra.mxu0 %v1268
        %1278 = vmatpush.bf16.msra.mxu0 %v1267
        %1279 = vmatpush.bf16.msra.mxu0 %v1266
        %1280 = vmatpush.bf16.msra.mxu0 %v1265
        %1281 = vmatpush.bf16.msra.mxu0 %v1264
        %1282 = vmatpush.bf16.msra.mxu0 %v1263
        %1283 = vmatpush.bf16.msra.mxu0 %v1262
        %1284 = vmatpush.bf16.msra.mxu0 %v1261
        %1285 = vmatmul.bf16.gmra.mxu0 %v1213
        %v1286 = vpop.f32.mrf.mxu0
        %v1287 = vadd.f32 %v1179, %v1286
        %v1288 = vpop.f32.mrf.mxu0
        %v1289 = vadd.f32 %v1179, %v1288
        %1290 = vmatmul.bf16.gmra.mxu0 %v1214
        %v1291 = vpop.f32.mrf.mxu0
        %v1292 = vadd.f32 %v1179, %v1291
        %v1293 = vpop.f32.mrf.mxu0
        %v1294 = vadd.f32 %v1179, %v1293
        %1295 = vmatmul.bf16.gmra.mxu0 %v1215
        %v1296 = vpop.f32.mrf.mxu0
        %v1297 = vadd.f32 %v1179, %v1296
        %v1298 = vpop.f32.mrf.mxu0
        %v1299 = vadd.f32 %v1179, %v1298
        %1300 = vmatmul.bf16.gmra.mxu0 %v1216
        %v1301 = vpop.f32.mrf.mxu0
        %v1302 = vadd.f32 %v1179, %v1301
        %v1303 = vpop.f32.mrf.mxu0
        %v1304 = vadd.f32 %v1179, %v1303
        %1305 = vmatmul.bf16.gmra.mxu0 %v1217
        %v1306 = vpop.f32.mrf.mxu0
        %v1307 = vadd.f32 %v1179, %v1306
        %v1308 = vpop.f32.mrf.mxu0
        %v1309 = vadd.f32 %v1179, %v1308
        %1310 = vmatmul.bf16.gmra.mxu0 %v1218
        %v1311 = vpop.f32.mrf.mxu0
        %v1312 = vadd.f32 %v1179, %v1311
        %v1313 = vpop.f32.mrf.mxu0
        %v1314 = vadd.f32 %v1179, %v1313
        %1315 = vmatmul.bf16.gmra.mxu0 %v1219
        %v1316 = vpop.f32.mrf.mxu0
        %v1317 = vadd.f32 %v1179, %v1316
        %v1318 = vpop.f32.mrf.mxu0
        %v1319 = vadd.f32 %v1179, %v1318
        %1320 = vmatmul.bf16.gmra.mxu0 %v1220
        %v1321 = vpop.f32.mrf.mxu0
        %v1322 = vadd.f32 %v1179, %v1321
        %v1323 = vpop.f32.mrf.mxu0
        %v1324 = vadd.f32 %v1179, %v1323
        %1325 = vdwg.mxu0
        %v1326 = vmul.f32 %v1287, 0.5
        %v1327 = vmul.f32 %v1289, 0.5
        %v1328 = vmul.f32 %v1292, 0.5
        %v1329 = vmul.f32 %v1294, 0.5
        %v1330 = vmul.f32 %v1297, 0.5
        %v1331 = vmul.f32 %v1299, 0.5
        %v1332 = vmul.f32 %v1302, 0.5
        %v1333 = vmul.f32 %v1304, 0.5
        %v1334 = vmul.f32 %v1307, 0.5
        %v1335 = vmul.f32 %v1309, 0.5
        %v1336 = vmul.f32 %v1312, 0.5
        %v1337 = vmul.f32 %v1314, 0.5
        %v1338 = vmul.f32 %v1317, 0.5
        %v1339 = vmul.f32 %v1319, 0.5
        %v1340 = vmul.f32 %v1322, 0.5
        %v1341 = vmul.f32 %v1324, 0.5
        %v1342 = vmul.f32 %v1287, 0.70710677
        %v1343 = vmul.f32 %v1289, 0.70710677
        %v1344 = vmul.f32 %v1292, 0.70710677
        %v1345 = vmul.f32 %v1294, 0.70710677
        %v1346 = vmul.f32 %v1297, 0.70710677
        %v1347 = vmul.f32 %v1299, 0.70710677
        %v1348 = vmul.f32 %v1302, 0.70710677
        %v1349 = vmul.f32 %v1304, 0.70710677
        %v1350 = vmul.f32 %v1307, 0.70710677
        %v1351 = vmul.f32 %v1309, 0.70710677
        %v1352 = vmul.f32 %v1312, 0.70710677
        %v1353 = vmul.f32 %v1314, 0.70710677
        %v1354 = vmul.f32 %v1317, 0.70710677
        %v1355 = vmul.f32 %v1319, 0.70710677
        %v1356 = vmul.f32 %v1322, 0.70710677
        %v1357 = vmul.f32 %v1324, 0.70710677
        %v1358 = vmul.f32 %v1342, %v1342
        %v1359 = vmin.f32 16.0, %v1358
        %v1360 = vmul.f32 %v1359, 2.1237322e-06
        %v1361 = vadd.f32 %v1360, 0.00028619796
        %v1362 = vmul.f32 %v1359, %v1361
        %v1363 = vadd.f32 %v1362, 0.0036580483
        %v1364 = vmul.f32 %v1359, %v1363
        %v1365 = vadd.f32 %v1364, 0.05243302
        %v1366 = vmul.f32 %v1359, %v1365
        %v1367 = vadd.f32 %v1366, 0.18741608
        %v1368 = vmul.f32 %v1359, %v1367
        %v1369 = vadd.f32 %v1368, 1.1283791
        %v1370 = vmul.f32 %v1342, %v1369
        %v1371 = vmul.f32 %v1359, 3.8918573e-05
        %v1372 = vadd.f32 %v1371, 0.001143296
        %v1373 = vmul.f32 %v1359, %v1372
        %v1374 = vadd.f32 %v1373, 0.014752088
        %v1375 = vmul.f32 %v1359, %v1374
        %v1376 = vadd.f32 %v1375, 0.112945676
        %v1377 = vmul.f32 %v1359, %v1376
        %v1378 = vadd.f32 %v1377, 0.4994258
        %v1379 = vmul.f32 %v1359, %v1378
        %v1380 = vadd.f32 %v1379, 1.0
        %v1381 = vrcp.pop %v1380
        %v1382 = vmul.f32 %v1380, %v1381
        %v1383 = vsub.f32 1.0, %v1382
        %v1384 = vmul.f32 %v1381, %v1383
        %v1385 = vadd.f32 %v1381, %v1384
        %vm1386 = vweird.f32 %v1380
        %vm1387 = vweird.f32 %v1381
        %vm1388 = vmor %vm1386, %vm1387
        %v1389 = vsel %vm1388, %v1381, %v1385
        %v1390 = vand.u32 2147483647, %v1380
        %vm1391 = vcmp.eq.f32.partialorder %v1390, 8.507059e+37
        %v1392 = vand.u32 %v1380, 2147483648
        %v1393 = vor.u32 1.1754944e-38, %v1392
        %v1394 = vsel %vm1391, %v1393, %v1389
        %v1395 = vmul.f32 %v1370, %v1394
        %v1396 = vmin.f32 %v1395, 1.0
        %v1397 = vmax.f32 %v1396, -1.0
        %v1398 = vmul.f32 %v1343, %v1343
        %v1399 = vmin.f32 16.0, %v1398
        %v1400 = vmul.f32 %v1399, 2.1237322e-06
        %v1401 = vadd.f32 %v1400, 0.00028619796
        %v1402 = vmul.f32 %v1399, %v1401
        %v1403 = vadd.f32 %v1402, 0.0036580483
        %v1404 = vmul.f32 %v1399, %v1403
        %v1405 = vadd.f32 %v1404, 0.05243302
        %v1406 = vmul.f32 %v1399, %v1405
        %v1407 = vadd.f32 %v1406, 0.18741608
        %v1408 = vmul.f32 %v1399, %v1407
        %v1409 = vadd.f32 %v1408, 1.1283791
        %v1410 = vmul.f32 %v1343, %v1409
        %v1411 = vmul.f32 %v1399, 3.8918573e-05
        %v1412 = vadd.f32 %v1411, 0.001143296
        %v1413 = vmul.f32 %v1399, %v1412
        %v1414 = vadd.f32 %v1413, 0.014752088
        %v1415 = vmul.f32 %v1399, %v1414
        %v1416 = vadd.f32 %v1415, 0.112945676
        %v1417 = vmul.f32 %v1399, %v1416
        %v1418 = vadd.f32 %v1417, 0.4994258
        %v1419 = vmul.f32 %v1399, %v1418
        %v1420 = vadd.f32 %v1419, 1.0
        %v1421 = vrcp.pop %v1420
        %v1422 = vmul.f32 %v1420, %v1421
        %v1423 = vsub.f32 1.0, %v1422
        %v1424 = vmul.f32 %v1421, %v1423
        %v1425 = vadd.f32 %v1421, %v1424
        %vm1426 = vweird.f32 %v1420
        %vm1427 = vweird.f32 %v1421
        %vm1428 = vmor %vm1426, %vm1427
        %v1429 = vsel %vm1428, %v1421, %v1425
        %v1430 = vand.u32 2147483647, %v1420
        %vm1431 = vcmp.eq.f32.partialorder %v1430, 8.507059e+37
        %v1432 = vand.u32 %v1420, 2147483648
        %v1433 = vor.u32 1.1754944e-38, %v1432
        %v1434 = vsel %vm1431, %v1433, %v1429
        %v1435 = vmul.f32 %v1410, %v1434
        %v1436 = vmin.f32 %v1435, 1.0
        %v1437 = vmax.f32 %v1436, -1.0
        %v1438 = vmul.f32 %v1344, %v1344
        %v1439 = vmin.f32 16.0, %v1438
        %v1440 = vmul.f32 %v1439, 2.1237322e-06
        %v1441 = vadd.f32 %v1440, 0.00028619796
        %v1442 = vmul.f32 %v1439, %v1441
        %v1443 = vadd.f32 %v1442, 0.0036580483
        %v1444 = vmul.f32 %v1439, %v1443
        %v1445 = vadd.f32 %v1444, 0.05243302
        %v1446 = vmul.f32 %v1439, %v1445
        %v1447 = vadd.f32 %v1446, 0.18741608
        %v1448 = vmul.f32 %v1439, %v1447
        %v1449 = vadd.f32 %v1448, 1.1283791
        %v1450 = vmul.f32 %v1344, %v1449
        %v1451 = vmul.f32 %v1439, 3.8918573e-05
        %v1452 = vadd.f32 %v1451, 0.001143296
        %v1453 = vmul.f32 %v1439, %v1452
        %v1454 = vadd.f32 %v1453, 0.014752088
        %v1455 = vmul.f32 %v1439, %v1454
        %v1456 = vadd.f32 %v1455, 0.112945676
        %v1457 = vmul.f32 %v1439, %v1456
        %v1458 = vadd.f32 %v1457, 0.4994258
        %v1459 = vmul.f32 %v1439, %v1458
        %v1460 = vadd.f32 %v1459, 1.0
        %v1461 = vrcp.pop %v1460
        %v1462 = vmul.f32 %v1460, %v1461
        %v1463 = vsub.f32 1.0, %v1462
        %v1464 = vmul.f32 %v1461, %v1463
        %v1465 = vadd.f32 %v1461, %v1464
        %vm1466 = vweird.f32 %v1460
        %vm1467 = vweird.f32 %v1461
        %vm1468 = vmor %vm1466, %vm1467
        %v1469 = vsel %vm1468, %v1461, %v1465
        %v1470 = vand.u32 2147483647, %v1460
        %vm1471 = vcmp.eq.f32.partialorder %v1470, 8.507059e+37
        %v1472 = vand.u32 %v1460, 2147483648
        %v1473 = vor.u32 1.1754944e-38, %v1472
        %v1474 = vsel %vm1471, %v1473, %v1469
        %v1475 = vmul.f32 %v1450, %v1474
        %v1476 = vmin.f32 %v1475, 1.0
        %v1477 = vmax.f32 %v1476, -1.0
        %v1478 = vmul.f32 %v1345, %v1345
        %v1479 = vmin.f32 16.0, %v1478
        %v1480 = vmul.f32 %v1479, 2.1237322e-06
        %v1481 = vadd.f32 %v1480, 0.00028619796
        %v1482 = vmul.f32 %v1479, %v1481
        %v1483 = vadd.f32 %v1482, 0.0036580483
        %v1484 = vmul.f32 %v1479, %v1483
        %v1485 = vadd.f32 %v1484, 0.05243302
        %v1486 = vmul.f32 %v1479, %v1485
        %v1487 = vadd.f32 %v1486, 0.18741608
        %v1488 = vmul.f32 %v1479, %v1487
        %v1489 = vadd.f32 %v1488, 1.1283791
        %v1490 = vmul.f32 %v1345, %v1489
        %v1491 = vmul.f32 %v1479, 3.8918573e-05
        %v1492 = vadd.f32 %v1491, 0.001143296
        %v1493 = vmul.f32 %v1479, %v1492
        %v1494 = vadd.f32 %v1493, 0.014752088
        %v1495 = vmul.f32 %v1479, %v1494
        %v1496 = vadd.f32 %v1495, 0.112945676
        %v1497 = vmul.f32 %v1479, %v1496
        %v1498 = vadd.f32 %v1497, 0.4994258
        %v1499 = vmul.f32 %v1479, %v1498
        %v1500 = vadd.f32 %v1499, 1.0
        %v1501 = vrcp.pop %v1500
        %v1502 = vmul.f32 %v1500, %v1501
        %v1503 = vsub.f32 1.0, %v1502
        %v1504 = vmul.f32 %v1501, %v1503
        %v1505 = vadd.f32 %v1501, %v1504
        %vm1506 = vweird.f32 %v1500
        %vm1507 = vweird.f32 %v1501
        %vm1508 = vmor %vm1506, %vm1507
        %v1509 = vsel %vm1508, %v1501, %v1505
        %v1510 = vand.u32 2147483647, %v1500
        %vm1511 = vcmp.eq.f32.partialorder %v1510, 8.507059e+37
        %v1512 = vand.u32 %v1500, 2147483648
        %v1513 = vor.u32 1.1754944e-38, %v1512
        %v1514 = vsel %vm1511, %v1513, %v1509
        %v1515 = vmul.f32 %v1490, %v1514
        %v1516 = vmin.f32 %v1515, 1.0
        %v1517 = vmax.f32 %v1516, -1.0
        %v1518 = vmul.f32 %v1346, %v1346
        %v1519 = vmin.f32 16.0, %v1518
        %v1520 = vmul.f32 %v1519, 2.1237322e-06
        %v1521 = vadd.f32 %v1520, 0.00028619796
        %v1522 = vmul.f32 %v1519, %v1521
        %v1523 = vadd.f32 %v1522, 0.0036580483
        %v1524 = vmul.f32 %v1519, %v1523
        %v1525 = vadd.f32 %v1524, 0.05243302
        %v1526 = vmul.f32 %v1519, %v1525
        %v1527 = vadd.f32 %v1526, 0.18741608
        %v1528 = vmul.f32 %v1519, %v1527
        %v1529 = vadd.f32 %v1528, 1.1283791
        %v1530 = vmul.f32 %v1346, %v1529
        %v1531 = vmul.f32 %v1519, 3.8918573e-05
        %v1532 = vadd.f32 %v1531, 0.001143296
        %v1533 = vmul.f32 %v1519, %v1532
        %v1534 = vadd.f32 %v1533, 0.014752088
        %v1535 = vmul.f32 %v1519, %v1534
        %v1536 = vadd.f32 %v1535, 0.112945676
        %v1537 = vmul.f32 %v1519, %v1536
        %v1538 = vadd.f32 %v1537, 0.4994258
        %v1539 = vmul.f32 %v1519, %v1538
        %v1540 = vadd.f32 %v1539, 1.0
        %v1541 = vrcp.pop %v1540
        %v1542 = vmul.f32 %v1540, %v1541
        %v1543 = vsub.f32 1.0, %v1542
        %v1544 = vmul.f32 %v1541, %v1543
        %v1545 = vadd.f32 %v1541, %v1544
        %vm1546 = vweird.f32 %v1540
        %vm1547 = vweird.f32 %v1541
        %vm1548 = vmor %vm1546, %vm1547
        %v1549 = vsel %vm1548, %v1541, %v1545
        %v1550 = vand.u32 2147483647, %v1540
        %vm1551 = vcmp.eq.f32.partialorder %v1550, 8.507059e+37
        %v1552 = vand.u32 %v1540, 2147483648
        %v1553 = vor.u32 1.1754944e-38, %v1552
        %v1554 = vsel %vm1551, %v1553, %v1549
        %v1555 = vmul.f32 %v1530, %v1554
        %v1556 = vmin.f32 %v1555, 1.0
        %v1557 = vmax.f32 %v1556, -1.0
        %v1558 = vmul.f32 %v1347, %v1347
        %v1559 = vmin.f32 16.0, %v1558
        %v1560 = vmul.f32 %v1559, 2.1237322e-06
        %v1561 = vadd.f32 %v1560, 0.00028619796
        %v1562 = vmul.f32 %v1559, %v1561
        %v1563 = vadd.f32 %v1562, 0.0036580483
        %v1564 = vmul.f32 %v1559, %v1563
        %v1565 = vadd.f32 %v1564, 0.05243302
        %v1566 = vmul.f32 %v1559, %v1565
        %v1567 = vadd.f32 %v1566, 0.18741608
        %v1568 = vmul.f32 %v1559, %v1567
        %v1569 = vadd.f32 %v1568, 1.1283791
        %v1570 = vmul.f32 %v1347, %v1569
        %v1571 = vmul.f32 %v1559, 3.8918573e-05
        %v1572 = vadd.f32 %v1571, 0.001143296
        %v1573 = vmul.f32 %v1559, %v1572
        %v1574 = vadd.f32 %v1573, 0.014752088
        %v1575 = vmul.f32 %v1559, %v1574
        %v1576 = vadd.f32 %v1575, 0.112945676
        %v1577 = vmul.f32 %v1559, %v1576
        %v1578 = vadd.f32 %v1577, 0.4994258
        %v1579 = vmul.f32 %v1559, %v1578
        %v1580 = vadd.f32 %v1579, 1.0
        %v1581 = vrcp.pop %v1580
        %v1582 = vmul.f32 %v1580, %v1581
        %v1583 = vsub.f32 1.0, %v1582
        %v1584 = vmul.f32 %v1581, %v1583
        %v1585 = vadd.f32 %v1581, %v1584
        %vm1586 = vweird.f32 %v1580
        %vm1587 = vweird.f32 %v1581
        %vm1588 = vmor %vm1586, %vm1587
        %v1589 = vsel %vm1588, %v1581, %v1585
        %v1590 = vand.u32 2147483647, %v1580
        %vm1591 = vcmp.eq.f32.partialorder %v1590, 8.507059e+37
        %v1592 = vand.u32 %v1580, 2147483648
        %v1593 = vor.u32 1.1754944e-38, %v1592
        %v1594 = vsel %vm1591, %v1593, %v1589
        %v1595 = vmul.f32 %v1570, %v1594
        %v1596 = vmin.f32 %v1595, 1.0
        %v1597 = vmax.f32 %v1596, -1.0
        %v1598 = vmul.f32 %v1348, %v1348
        %v1599 = vmin.f32 16.0, %v1598
        %v1600 = vmul.f32 %v1599, 2.1237322e-06
        %v1601 = vadd.f32 %v1600, 0.00028619796
        %v1602 = vmul.f32 %v1599, %v1601
        %v1603 = vadd.f32 %v1602, 0.0036580483
        %v1604 = vmul.f32 %v1599, %v1603
        %v1605 = vadd.f32 %v1604, 0.05243302
        %v1606 = vmul.f32 %v1599, %v1605
        %v1607 = vadd.f32 %v1606, 0.18741608
        %v1608 = vmul.f32 %v1599, %v1607
        %v1609 = vadd.f32 %v1608, 1.1283791
        %v1610 = vmul.f32 %v1348, %v1609
        %v1611 = vmul.f32 %v1599, 3.8918573e-05
        %v1612 = vadd.f32 %v1611, 0.001143296
        %v1613 = vmul.f32 %v1599, %v1612
        %v1614 = vadd.f32 %v1613, 0.014752088
        %v1615 = vmul.f32 %v1599, %v1614
        %v1616 = vadd.f32 %v1615, 0.112945676
        %v1617 = vmul.f32 %v1599, %v1616
        %v1618 = vadd.f32 %v1617, 0.4994258
        %v1619 = vmul.f32 %v1599, %v1618
        %v1620 = vadd.f32 %v1619, 1.0
        %v1621 = vrcp.pop %v1620
        %v1622 = vmul.f32 %v1620, %v1621
        %v1623 = vsub.f32 1.0, %v1622
        %v1624 = vmul.f32 %v1621, %v1623
        %v1625 = vadd.f32 %v1621, %v1624
        %vm1626 = vweird.f32 %v1620
        %vm1627 = vweird.f32 %v1621
        %vm1628 = vmor %vm1626, %vm1627
        %v1629 = vsel %vm1628, %v1621, %v1625
        %v1630 = vand.u32 2147483647, %v1620
        %vm1631 = vcmp.eq.f32.partialorder %v1630, 8.507059e+37
        %v1632 = vand.u32 %v1620, 2147483648
        %v1633 = vor.u32 1.1754944e-38, %v1632
        %v1634 = vsel %vm1631, %v1633, %v1629
        %v1635 = vmul.f32 %v1610, %v1634
        %v1636 = vmin.f32 %v1635, 1.0
        %v1637 = vmax.f32 %v1636, -1.0
        %v1638 = vmul.f32 %v1349, %v1349
        %v1639 = vmin.f32 16.0, %v1638
        %v1640 = vmul.f32 %v1639, 2.1237322e-06
        %v1641 = vadd.f32 %v1640, 0.00028619796
        %v1642 = vmul.f32 %v1639, %v1641
        %v1643 = vadd.f32 %v1642, 0.0036580483
        %v1644 = vmul.f32 %v1639, %v1643
        %v1645 = vadd.f32 %v1644, 0.05243302
        %v1646 = vmul.f32 %v1639, %v1645
        %v1647 = vadd.f32 %v1646, 0.18741608
        %v1648 = vmul.f32 %v1639, %v1647
        %v1649 = vadd.f32 %v1648, 1.1283791
        %v1650 = vmul.f32 %v1349, %v1649
        %v1651 = vmul.f32 %v1639, 3.8918573e-05
        %v1652 = vadd.f32 %v1651, 0.001143296
        %v1653 = vmul.f32 %v1639, %v1652
        %v1654 = vadd.f32 %v1653, 0.014752088
        %v1655 = vmul.f32 %v1639, %v1654
        %v1656 = vadd.f32 %v1655, 0.112945676
        %v1657 = vmul.f32 %v1639, %v1656
        %v1658 = vadd.f32 %v1657, 0.4994258
        %v1659 = vmul.f32 %v1639, %v1658
        %v1660 = vadd.f32 %v1659, 1.0
        %v1661 = vrcp.pop %v1660
        %v1662 = vmul.f32 %v1660, %v1661
        %v1663 = vsub.f32 1.0, %v1662
        %v1664 = vmul.f32 %v1661, %v1663
        %v1665 = vadd.f32 %v1661, %v1664
        %vm1666 = vweird.f32 %v1660
        %vm1667 = vweird.f32 %v1661
        %vm1668 = vmor %vm1666, %vm1667
        %v1669 = vsel %vm1668, %v1661, %v1665
        %v1670 = vand.u32 2147483647, %v1660
        %vm1671 = vcmp.eq.f32.partialorder %v1670, 8.507059e+37
        %v1672 = vand.u32 %v1660, 2147483648
        %v1673 = vor.u32 1.1754944e-38, %v1672
        %v1674 = vsel %vm1671, %v1673, %v1669
        %v1675 = vmul.f32 %v1650, %v1674
        %v1676 = vmin.f32 %v1675, 1.0
        %v1677 = vmax.f32 %v1676, -1.0
        %v1678 = vmul.f32 %v1350, %v1350
        %v1679 = vmin.f32 16.0, %v1678
        %v1680 = vmul.f32 %v1679, 2.1237322e-06
        %v1681 = vadd.f32 %v1680, 0.00028619796
        %v1682 = vmul.f32 %v1679, %v1681
        %v1683 = vadd.f32 %v1682, 0.0036580483
        %v1684 = vmul.f32 %v1679, %v1683
        %v1685 = vadd.f32 %v1684, 0.05243302
        %v1686 = vmul.f32 %v1679, %v1685
        %v1687 = vadd.f32 %v1686, 0.18741608
        %v1688 = vmul.f32 %v1679, %v1687
        %v1689 = vadd.f32 %v1688, 1.1283791
        %v1690 = vmul.f32 %v1350, %v1689
        %v1691 = vmul.f32 %v1679, 3.8918573e-05
        %v1692 = vadd.f32 %v1691, 0.001143296
        %v1693 = vmul.f32 %v1679, %v1692
        %v1694 = vadd.f32 %v1693, 0.014752088
        %v1695 = vmul.f32 %v1679, %v1694
        %v1696 = vadd.f32 %v1695, 0.112945676
        %v1697 = vmul.f32 %v1679, %v1696
        %v1698 = vadd.f32 %v1697, 0.4994258
        %v1699 = vmul.f32 %v1679, %v1698
        %v1700 = vadd.f32 %v1699, 1.0
        %v1701 = vrcp.pop %v1700
        %v1702 = vmul.f32 %v1700, %v1701
        %v1703 = vsub.f32 1.0, %v1702
        %v1704 = vmul.f32 %v1701, %v1703
        %v1705 = vadd.f32 %v1701, %v1704
        %vm1706 = vweird.f32 %v1700
        %vm1707 = vweird.f32 %v1701
        %vm1708 = vmor %vm1706, %vm1707
        %v1709 = vsel %vm1708, %v1701, %v1705
        %v1710 = vand.u32 2147483647, %v1700
        %vm1711 = vcmp.eq.f32.partialorder %v1710, 8.507059e+37
        %v1712 = vand.u32 %v1700, 2147483648
        %v1713 = vor.u32 1.1754944e-38, %v1712
        %v1714 = vsel %vm1711, %v1713, %v1709
        %v1715 = vmul.f32 %v1690, %v1714
        %v1716 = vmin.f32 %v1715, 1.0
        %v1717 = vmax.f32 %v1716, -1.0
        %v1718 = vmul.f32 %v1351, %v1351
        %v1719 = vmin.f32 16.0, %v1718
        %v1720 = vmul.f32 %v1719, 2.1237322e-06
        %v1721 = vadd.f32 %v1720, 0.00028619796
        %v1722 = vmul.f32 %v1719, %v1721
        %v1723 = vadd.f32 %v1722, 0.0036580483
        %v1724 = vmul.f32 %v1719, %v1723
        %v1725 = vadd.f32 %v1724, 0.05243302
        %v1726 = vmul.f32 %v1719, %v1725
        %v1727 = vadd.f32 %v1726, 0.18741608
        %v1728 = vmul.f32 %v1719, %v1727
        %v1729 = vadd.f32 %v1728, 1.1283791
        %v1730 = vmul.f32 %v1351, %v1729
        %v1731 = vmul.f32 %v1719, 3.8918573e-05
        %v1732 = vadd.f32 %v1731, 0.001143296
        %v1733 = vmul.f32 %v1719, %v1732
        %v1734 = vadd.f32 %v1733, 0.014752088
        %v1735 = vmul.f32 %v1719, %v1734
        %v1736 = vadd.f32 %v1735, 0.112945676
        %v1737 = vmul.f32 %v1719, %v1736
        %v1738 = vadd.f32 %v1737, 0.4994258
        %v1739 = vmul.f32 %v1719, %v1738
        %v1740 = vadd.f32 %v1739, 1.0
        %v1741 = vrcp.pop %v1740
        %v1742 = vmul.f32 %v1740, %v1741
        %v1743 = vsub.f32 1.0, %v1742
        %v1744 = vmul.f32 %v1741, %v1743
        %v1745 = vadd.f32 %v1741, %v1744
        %vm1746 = vweird.f32 %v1740
        %vm1747 = vweird.f32 %v1741
        %vm1748 = vmor %vm1746, %vm1747
        %v1749 = vsel %vm1748, %v1741, %v1745
        %v1750 = vand.u32 2147483647, %v1740
        %vm1751 = vcmp.eq.f32.partialorder %v1750, 8.507059e+37
        %v1752 = vand.u32 %v1740, 2147483648
        %v1753 = vor.u32 1.1754944e-38, %v1752
        %v1754 = vsel %vm1751, %v1753, %v1749
        %v1755 = vmul.f32 %v1730, %v1754
        %v1756 = vmin.f32 %v1755, 1.0
        %v1757 = vmax.f32 %v1756, -1.0
        %v1758 = vmul.f32 %v1352, %v1352
        %v1759 = vmin.f32 16.0, %v1758
        %v1760 = vmul.f32 %v1759, 2.1237322e-06
        %v1761 = vadd.f32 %v1760, 0.00028619796
        %v1762 = vmul.f32 %v1759, %v1761
        %v1763 = vadd.f32 %v1762, 0.0036580483
        %v1764 = vmul.f32 %v1759, %v1763
        %v1765 = vadd.f32 %v1764, 0.05243302
        %v1766 = vmul.f32 %v1759, %v1765
        %v1767 = vadd.f32 %v1766, 0.18741608
        %v1768 = vmul.f32 %v1759, %v1767
        %v1769 = vadd.f32 %v1768, 1.1283791
        %v1770 = vmul.f32 %v1352, %v1769
        %v1771 = vmul.f32 %v1759, 3.8918573e-05
        %v1772 = vadd.f32 %v1771, 0.001143296
        %v1773 = vmul.f32 %v1759, %v1772
        %v1774 = vadd.f32 %v1773, 0.014752088
        %v1775 = vmul.f32 %v1759, %v1774
        %v1776 = vadd.f32 %v1775, 0.112945676
        %v1777 = vmul.f32 %v1759, %v1776
        %v1778 = vadd.f32 %v1777, 0.4994258
        %v1779 = vmul.f32 %v1759, %v1778
        %v1780 = vadd.f32 %v1779, 1.0
        %v1781 = vrcp.pop %v1780
        %v1782 = vmul.f32 %v1780, %v1781
        %v1783 = vsub.f32 1.0, %v1782
        %v1784 = vmul.f32 %v1781, %v1783
        %v1785 = vadd.f32 %v1781, %v1784
        %vm1786 = vweird.f32 %v1780
        %vm1787 = vweird.f32 %v1781
        %vm1788 = vmor %vm1786, %vm1787
        %v1789 = vsel %vm1788, %v1781, %v1785
        %v1790 = vand.u32 2147483647, %v1780
        %vm1791 = vcmp.eq.f32.partialorder %v1790, 8.507059e+37
        %v1792 = vand.u32 %v1780, 2147483648
        %v1793 = vor.u32 1.1754944e-38, %v1792
        %v1794 = vsel %vm1791, %v1793, %v1789
        %v1795 = vmul.f32 %v1770, %v1794
        %v1796 = vmin.f32 %v1795, 1.0
        %v1797 = vmax.f32 %v1796, -1.0
        %v1798 = vmul.f32 %v1353, %v1353
        %v1799 = vmin.f32 16.0, %v1798
        %v1800 = vmul.f32 %v1799, 2.1237322e-06
        %v1801 = vadd.f32 %v1800, 0.00028619796
        %v1802 = vmul.f32 %v1799, %v1801
        %v1803 = vadd.f32 %v1802, 0.0036580483
        %v1804 = vmul.f32 %v1799, %v1803
        %v1805 = vadd.f32 %v1804, 0.05243302
        %v1806 = vmul.f32 %v1799, %v1805
        %v1807 = vadd.f32 %v1806, 0.18741608
        %v1808 = vmul.f32 %v1799, %v1807
        %v1809 = vadd.f32 %v1808, 1.1283791
        %v1810 = vmul.f32 %v1353, %v1809
        %v1811 = vmul.f32 %v1799, 3.8918573e-05
        %v1812 = vadd.f32 %v1811, 0.001143296
        %v1813 = vmul.f32 %v1799, %v1812
        %v1814 = vadd.f32 %v1813, 0.014752088
        %v1815 = vmul.f32 %v1799, %v1814
        %v1816 = vadd.f32 %v1815, 0.112945676
        %v1817 = vmul.f32 %v1799, %v1816
        %v1818 = vadd.f32 %v1817, 0.4994258
        %v1819 = vmul.f32 %v1799, %v1818
        %v1820 = vadd.f32 %v1819, 1.0
        %v1821 = vrcp.pop %v1820
        %v1822 = vmul.f32 %v1820, %v1821
        %v1823 = vsub.f32 1.0, %v1822
        %v1824 = vmul.f32 %v1821, %v1823
        %v1825 = vadd.f32 %v1821, %v1824
        %vm1826 = vweird.f32 %v1820
        %vm1827 = vweird.f32 %v1821
        %vm1828 = vmor %vm1826, %vm1827
        %v1829 = vsel %vm1828, %v1821, %v1825
        %v1830 = vand.u32 2147483647, %v1820
        %vm1831 = vcmp.eq.f32.partialorder %v1830, 8.507059e+37
        %v1832 = vand.u32 %v1820, 2147483648
        %v1833 = vor.u32 1.1754944e-38, %v1832
        %v1834 = vsel %vm1831, %v1833, %v1829
        %v1835 = vmul.f32 %v1810, %v1834
        %v1836 = vmin.f32 %v1835, 1.0
        %v1837 = vmax.f32 %v1836, -1.0
        %v1838 = vmul.f32 %v1354, %v1354
        %v1839 = vmin.f32 16.0, %v1838
        %v1840 = vmul.f32 %v1839, 2.1237322e-06
        %v1841 = vadd.f32 %v1840, 0.00028619796
        %v1842 = vmul.f32 %v1839, %v1841
        %v1843 = vadd.f32 %v1842, 0.0036580483
        %v1844 = vmul.f32 %v1839, %v1843
        %v1845 = vadd.f32 %v1844, 0.05243302
        %v1846 = vmul.f32 %v1839, %v1845
        %v1847 = vadd.f32 %v1846, 0.18741608
        %v1848 = vmul.f32 %v1839, %v1847
        %v1849 = vadd.f32 %v1848, 1.1283791
        %v1850 = vmul.f32 %v1354, %v1849
        %v1851 = vmul.f32 %v1839, 3.8918573e-05
        %v1852 = vadd.f32 %v1851, 0.001143296
        %v1853 = vmul.f32 %v1839, %v1852
        %v1854 = vadd.f32 %v1853, 0.014752088
        %v1855 = vmul.f32 %v1839, %v1854
        %v1856 = vadd.f32 %v1855, 0.112945676
        %v1857 = vmul.f32 %v1839, %v1856
        %v1858 = vadd.f32 %v1857, 0.4994258
        %v1859 = vmul.f32 %v1839, %v1858
        %v1860 = vadd.f32 %v1859, 1.0
        %v1861 = vrcp.pop %v1860
        %v1862 = vmul.f32 %v1860, %v1861
        %v1863 = vsub.f32 1.0, %v1862
        %v1864 = vmul.f32 %v1861, %v1863
        %v1865 = vadd.f32 %v1861, %v1864
        %vm1866 = vweird.f32 %v1860
        %vm1867 = vweird.f32 %v1861
        %vm1868 = vmor %vm1866, %vm1867
        %v1869 = vsel %vm1868, %v1861, %v1865
        %v1870 = vand.u32 2147483647, %v1860
        %vm1871 = vcmp.eq.f32.partialorder %v1870, 8.507059e+37
        %v1872 = vand.u32 %v1860, 2147483648
        %v1873 = vor.u32 1.1754944e-38, %v1872
        %v1874 = vsel %vm1871, %v1873, %v1869
        %v1875 = vmul.f32 %v1850, %v1874
        %v1876 = vmin.f32 %v1875, 1.0
        %v1877 = vmax.f32 %v1876, -1.0
        %v1878 = vmul.f32 %v1355, %v1355
        %v1879 = vmin.f32 16.0, %v1878
        %v1880 = vmul.f32 %v1879, 2.1237322e-06
        %v1881 = vadd.f32 %v1880, 0.00028619796
        %v1882 = vmul.f32 %v1879, %v1881
        %v1883 = vadd.f32 %v1882, 0.0036580483
        %v1884 = vmul.f32 %v1879, %v1883
        %v1885 = vadd.f32 %v1884, 0.05243302
        %v1886 = vmul.f32 %v1879, %v1885
        %v1887 = vadd.f32 %v1886, 0.18741608
        %v1888 = vmul.f32 %v1879, %v1887
        %v1889 = vadd.f32 %v1888, 1.1283791
        %v1890 = vmul.f32 %v1355, %v1889
        %v1891 = vmul.f32 %v1879, 3.8918573e-05
        %v1892 = vadd.f32 %v1891, 0.001143296
        %v1893 = vmul.f32 %v1879, %v1892
        %v1894 = vadd.f32 %v1893, 0.014752088
        %v1895 = vmul.f32 %v1879, %v1894
        %v1896 = vadd.f32 %v1895, 0.112945676
        %v1897 = vmul.f32 %v1879, %v1896
        %v1898 = vadd.f32 %v1897, 0.4994258
        %v1899 = vmul.f32 %v1879, %v1898
        %v1900 = vadd.f32 %v1899, 1.0
        %v1901 = vrcp.pop %v1900
        %v1902 = vmul.f32 %v1900, %v1901
        %v1903 = vsub.f32 1.0, %v1902
        %v1904 = vmul.f32 %v1901, %v1903
        %v1905 = vadd.f32 %v1901, %v1904
        %vm1906 = vweird.f32 %v1900
        %vm1907 = vweird.f32 %v1901
        %vm1908 = vmor %vm1906, %vm1907
        %v1909 = vsel %vm1908, %v1901, %v1905
        %v1910 = vand.u32 2147483647, %v1900
        %vm1911 = vcmp.eq.f32.partialorder %v1910, 8.507059e+37
        %v1912 = vand.u32 %v1900, 2147483648
        %v1913 = vor.u32 1.1754944e-38, %v1912
        %v1914 = vsel %vm1911, %v1913, %v1909
        %v1915 = vmul.f32 %v1890, %v1914
        %v1916 = vmin.f32 %v1915, 1.0
        %v1917 = vmax.f32 %v1916, -1.0
        %v1918 = vmul.f32 %v1356, %v1356
        %v1919 = vmin.f32 16.0, %v1918
        %v1920 = vmul.f32 %v1919, 2.1237322e-06
        %v1921 = vadd.f32 %v1920, 0.00028619796
        %v1922 = vmul.f32 %v1919, %v1921
        %v1923 = vadd.f32 %v1922, 0.0036580483
        %v1924 = vmul.f32 %v1919, %v1923
        %v1925 = vadd.f32 %v1924, 0.05243302
        %v1926 = vmul.f32 %v1919, %v1925
        %v1927 = vadd.f32 %v1926, 0.18741608
        %v1928 = vmul.f32 %v1919, %v1927
        %v1929 = vadd.f32 %v1928, 1.1283791
        %v1930 = vmul.f32 %v1356, %v1929
        %v1931 = vmul.f32 %v1919, 3.8918573e-05
        %v1932 = vadd.f32 %v1931, 0.001143296
        %v1933 = vmul.f32 %v1919, %v1932
        %v1934 = vadd.f32 %v1933, 0.014752088
        %v1935 = vmul.f32 %v1919, %v1934
        %v1936 = vadd.f32 %v1935, 0.112945676
        %v1937 = vmul.f32 %v1919, %v1936
        %v1938 = vadd.f32 %v1937, 0.4994258
        %v1939 = vmul.f32 %v1919, %v1938
        %v1940 = vadd.f32 %v1939, 1.0
        %v1941 = vrcp.pop %v1940
        %v1942 = vmul.f32 %v1940, %v1941
        %v1943 = vsub.f32 1.0, %v1942
        %v1944 = vmul.f32 %v1941, %v1943
        %v1945 = vadd.f32 %v1941, %v1944
        %vm1946 = vweird.f32 %v1940
        %vm1947 = vweird.f32 %v1941
        %vm1948 = vmor %vm1946, %vm1947
        %v1949 = vsel %vm1948, %v1941, %v1945
        %v1950 = vand.u32 2147483647, %v1940
        %vm1951 = vcmp.eq.f32.partialorder %v1950, 8.507059e+37
        %v1952 = vand.u32 %v1940, 2147483648
        %v1953 = vor.u32 1.1754944e-38, %v1952
        %v1954 = vsel %vm1951, %v1953, %v1949
        %v1955 = vmul.f32 %v1930, %v1954
        %v1956 = vmin.f32 %v1955, 1.0
        %v1957 = vmax.f32 %v1956, -1.0
        %v1958 = vmul.f32 %v1357, %v1357
        %v1959 = vmin.f32 16.0, %v1958
        %v1960 = vmul.f32 %v1959, 2.1237322e-06
        %v1961 = vadd.f32 %v1960, 0.00028619796
        %v1962 = vmul.f32 %v1959, %v1961
        %v1963 = vadd.f32 %v1962, 0.0036580483
        %v1964 = vmul.f32 %v1959, %v1963
        %v1965 = vadd.f32 %v1964, 0.05243302
        %v1966 = vmul.f32 %v1959, %v1965
        %v1967 = vadd.f32 %v1966, 0.18741608
        %v1968 = vmul.f32 %v1959, %v1967
        %v1969 = vadd.f32 %v1968, 1.1283791
        %v1970 = vmul.f32 %v1357, %v1969
        %v1971 = vmul.f32 %v1959, 3.8918573e-05
        %v1972 = vadd.f32 %v1971, 0.001143296
        %v1973 = vmul.f32 %v1959, %v1972
        %v1974 = vadd.f32 %v1973, 0.014752088
        %v1975 = vmul.f32 %v1959, %v1974
        %v1976 = vadd.f32 %v1975, 0.112945676
        %v1977 = vmul.f32 %v1959, %v1976
        %v1978 = vadd.f32 %v1977, 0.4994258
        %v1979 = vmul.f32 %v1959, %v1978
        %v1980 = vadd.f32 %v1979, 1.0
        %v1981 = vrcp.pop %v1980
        %v1982 = vmul.f32 %v1980, %v1981
        %v1983 = vsub.f32 1.0, %v1982
        %v1984 = vmul.f32 %v1981, %v1983
        %v1985 = vadd.f32 %v1981, %v1984
        %vm1986 = vweird.f32 %v1980
        %vm1987 = vweird.f32 %v1981
        %vm1988 = vmor %vm1986, %vm1987
        %v1989 = vsel %vm1988, %v1981, %v1985
        %v1990 = vand.u32 2147483647, %v1980
        %vm1991 = vcmp.eq.f32.partialorder %v1990, 8.507059e+37
        %v1992 = vand.u32 %v1980, 2147483648
        %v1993 = vor.u32 1.1754944e-38, %v1992
        %v1994 = vsel %vm1991, %v1993, %v1989
        %v1995 = vmul.f32 %v1970, %v1994
        %v1996 = vmin.f32 %v1995, 1.0
        %v1997 = vmax.f32 %v1996, -1.0
        %v1998 = vadd.f32 %v1397, 1.0
        %v1999 = vadd.f32 %v1437, 1.0
        %v2000 = vadd.f32 %v1477, 1.0
        %v2001 = vadd.f32 %v1517, 1.0
        %v2002 = vadd.f32 %v1557, 1.0
        %v2003 = vadd.f32 %v1597, 1.0
        %v2004 = vadd.f32 %v1637, 1.0
        %v2005 = vadd.f32 %v1677, 1.0
        %v2006 = vadd.f32 %v1717, 1.0
        %v2007 = vadd.f32 %v1757, 1.0
        %v2008 = vadd.f32 %v1797, 1.0
        %v2009 = vadd.f32 %v1837, 1.0
        %v2010 = vadd.f32 %v1877, 1.0
        %v2011 = vadd.f32 %v1917, 1.0
        %v2012 = vadd.f32 %v1957, 1.0
        %v2013 = vadd.f32 %v1997, 1.0
        %v2014 = vmul.f32 %v1326, %v1998
        %v2015 = vmul.f32 %v1327, %v1999
        %v2016 = vmul.f32 %v1328, %v2000
        %v2017 = vmul.f32 %v1329, %v2001
        %v2018 = vmul.f32 %v1330, %v2002
        %v2019 = vmul.f32 %v1331, %v2003
        %v2020 = vmul.f32 %v1332, %v2004
        %v2021 = vmul.f32 %v1333, %v2005
        %v2022 = vmul.f32 %v1334, %v2006
        %v2023 = vmul.f32 %v1335, %v2007
        %v2024 = vmul.f32 %v1336, %v2008
        %v2025 = vmul.f32 %v1337, %v2009
        %v2026 = vmul.f32 %v1338, %v2010
        %v2027 = vmul.f32 %v1339, %v2011
        %v2028 = vmul.f32 %v1340, %v2012
        %v2029 = vmul.f32 %v1341, %v2013
        %v2030 = vld [vmem:[#allocation3] sm:$0xff]
        %v2031 = vld [vmem:[#allocation3 + $0x8] sm:$0xff]
        %v2032 = vld [vmem:[#allocation3 + $0x10] sm:$0xff]
        %v2033 = vld [vmem:[#allocation3 + $0x18] sm:$0xff]
        %v2034 = vld [vmem:[#allocation3 + $0x20] sm:$0xff]
        %v2035 = vld [vmem:[#allocation3 + $0x28] sm:$0xff]
        %v2036 = vld [vmem:[#allocation3 + $0x30] sm:$0xff]
        %v2037 = vld [vmem:[#allocation3 + $0x38] sm:$0xff]
        %v2038 = vld [vmem:[#allocation3 + $0x40] sm:$0xff]
        %v2039 = vld [vmem:[#allocation3 + $0x48] sm:$0xff]
        %v2040 = vld [vmem:[#allocation3 + $0x50] sm:$0xff]
        %v2041 = vld [vmem:[#allocation3 + $0x58] sm:$0xff]
        %v2042 = vld [vmem:[#allocation3 + $0x60] sm:$0xff]
        %v2043 = vld [vmem:[#allocation3 + $0x68] sm:$0xff]
        %v2044 = vld [vmem:[#allocation3 + $0x70] sm:$0xff]
        %v2045 = vld [vmem:[#allocation3 + $0x78] sm:$0xff]
        %v2046 = vpack.c.bf16 %v2015, %v2014
        %v2047 = vpack.c.bf16 %v2017, %v2016
        %v2048 = vpack.c.bf16 %v2019, %v2018
        %v2049 = vpack.c.bf16 %v2021, %v2020
        %v2050 = vpack.c.bf16 %v2023, %v2022
        %v2051 = vpack.c.bf16 %v2025, %v2024
        %v2052 = vpack.c.bf16 %v2027, %v2026
        %v2053 = vpack.c.bf16 %v2029, %v2028
        %v2054 = vld [vmem:[#allocation7] sm:$0xf]
        %v2055 = vld [vmem:[#allocation7 + $0x4] sm:$0xf]
        %v2056 = vld [vmem:[#allocation7 + $0x8] sm:$0xf]
        %v2057 = vld [vmem:[#allocation7 + $0xc] sm:$0xf]
        %v2058 = vld [vmem:[#allocation7 + $0x10] sm:$0xf]
        %v2059 = vld [vmem:[#allocation7 + $0x14] sm:$0xf]
        %v2060 = vld [vmem:[#allocation7 + $0x18] sm:$0xf]
        %v2061 = vld [vmem:[#allocation7 + $0x1c] sm:$0xf]
        %v2062 = vld [vmem:[#allocation7 + $0x20] sm:$0xf]
        %v2063 = vld [vmem:[#allocation7 + $0x24] sm:$0xf]
        %v2064 = vld [vmem:[#allocation7 + $0x28] sm:$0xf]
        %v2065 = vld [vmem:[#allocation7 + $0x2c] sm:$0xf]
        %v2066 = vld [vmem:[#allocation7 + $0x30] sm:$0xf]
        %v2067 = vld [vmem:[#allocation7 + $0x34] sm:$0xf]
        %v2068 = vld [vmem:[#allocation7 + $0x38] sm:$0xf]
        %v2069 = vld [vmem:[#allocation7 + $0x3c] sm:$0xf]
        %v2086 = vunpack.c.l.b16 %v2054
        %v2087 = vunpack.c.l.b16 %v2055
        %v2088 = vunpack.c.l.b16 %v2056
        %v2089 = vunpack.c.l.b16 %v2057
        %v2090 = vunpack.c.l.b16 %v2058
        %v2091 = vunpack.c.l.b16 %v2059
        %v2092 = vunpack.c.l.b16 %v2060
        %v2093 = vunpack.c.l.b16 %v2061
        %v2094 = vunpack.c.l.b16 %v2062
        %v2095 = vunpack.c.l.b16 %v2063
        %v2096 = vunpack.c.l.b16 %v2064
        %v2097 = vunpack.c.l.b16 %v2065
        %v2098 = vunpack.c.l.b16 %v2066
        %v2099 = vunpack.c.l.b16 %v2067
        %v2100 = vunpack.c.l.b16 %v2068
        %v2101 = vunpack.c.l.b16 %v2069
        %v2102 = vpack.c.b16 %v2087, %v2086
        %v2103 = vpack.c.b16 %v2089, %v2088
        %v2104 = vpack.c.b16 %v2091, %v2090
        %v2105 = vpack.c.b16 %v2093, %v2092
        %v2106 = vpack.c.b16 %v2095, %v2094
        %v2107 = vpack.c.b16 %v2097, %v2096
        %v2108 = vpack.c.b16 %v2099, %v2098
        %v2109 = vpack.c.b16 %v2101, %v2100
        %2118 = vmatpush.bf16.msra.mxu0 %v2109
        %2119 = vmatpush.bf16.msra.mxu0 %v2108
        %2120 = vmatpush.bf16.msra.mxu0 %v2107
        %2121 = vmatpush.bf16.msra.mxu0 %v2106
        %2122 = vmatpush.bf16.msra.mxu0 %v2105
        %2123 = vmatpush.bf16.msra.mxu0 %v2104
        %2124 = vmatpush.bf16.msra.mxu0 %v2103
        %2125 = vmatpush.bf16.msra.mxu0 %v2102
        %2126 = vmatmul.bf16.gmra.mxu0 %v2046
        %v2127 = vpop.f32.mrf.mxu0
        %v2128 = vadd.f32 0.0, %v2127
        %v2129 = vpop.f32.mrf.mxu0
        %v2130 = vadd.f32 0.0, %v2129
        %2131 = vmatmul.bf16.gmra.mxu0 %v2047
        %v2132 = vpop.f32.mrf.mxu0
        %v2133 = vadd.f32 0.0, %v2132
        %v2134 = vpop.f32.mrf.mxu0
        %v2135 = vadd.f32 0.0, %v2134
        %2136 = vmatmul.bf16.gmra.mxu0 %v2048
        %v2137 = vpop.f32.mrf.mxu0
        %v2138 = vadd.f32 0.0, %v2137
        %v2139 = vpop.f32.mrf.mxu0
        %v2140 = vadd.f32 0.0, %v2139
        %2141 = vmatmul.bf16.gmra.mxu0 %v2049
        %v2142 = vpop.f32.mrf.mxu0
        %v2143 = vadd.f32 0.0, %v2142
        %v2144 = vpop.f32.mrf.mxu0
        %v2145 = vadd.f32 0.0, %v2144
        %2146 = vmatmul.bf16.gmra.mxu0 %v2050
        %v2147 = vpop.f32.mrf.mxu0
        %v2148 = vadd.f32 0.0, %v2147
        %v2149 = vpop.f32.mrf.mxu0
        %v2150 = vadd.f32 0.0, %v2149
        %2151 = vmatmul.bf16.gmra.mxu0 %v2051
        %v2152 = vpop.f32.mrf.mxu0
        %v2153 = vadd.f32 0.0, %v2152
        %v2154 = vpop.f32.mrf.mxu0
        %v2155 = vadd.f32 0.0, %v2154
        %2156 = vmatmul.bf16.gmra.mxu0 %v2052
        %v2157 = vpop.f32.mrf.mxu0
        %v2158 = vadd.f32 0.0, %v2157
        %v2159 = vpop.f32.mrf.mxu0
        %v2160 = vadd.f32 0.0, %v2159
        %2161 = vmatmul.bf16.gmra.mxu0 %v2053
        %v2162 = vpop.f32.mrf.mxu0
        %v2163 = vadd.f32 0.0, %v2162
        %v2164 = vpop.f32.mrf.mxu0
        %v2165 = vadd.f32 0.0, %v2164
        %2166 = vdwg.mxu0
        %v2167 = vadd.f32 %v2030, %v2128
        %v2168 = vadd.f32 %v2031, %v2130
        %v2169 = vadd.f32 %v2032, %v2133
        %v2170 = vadd.f32 %v2033, %v2135
        %v2171 = vadd.f32 %v2034, %v2138
        %v2172 = vadd.f32 %v2035, %v2140
        %v2173 = vadd.f32 %v2036, %v2143
        %v2174 = vadd.f32 %v2037, %v2145
        %v2175 = vadd.f32 %v2038, %v2148
        %v2176 = vadd.f32 %v2039, %v2150
        %v2177 = vadd.f32 %v2040, %v2153
        %v2178 = vadd.f32 %v2041, %v2155
        %v2179 = vadd.f32 %v2042, %v2158
        %v2180 = vadd.f32 %v2043, %v2160
        %v2181 = vadd.f32 %v2044, %v2163
        %v2182 = vadd.f32 %v2045, %v2165
        %2183 = vst [vmem:[#allocation3] sm:$0xff] %v2167
        %2184 = vst [vmem:[#allocation3 + $0x8] sm:$0xff] %v2168
        %2185 = vst [vmem:[#allocation3 + $0x10] sm:$0xff] %v2169
        %2186 = vst [vmem:[#allocation3 + $0x18] sm:$0xff] %v2170
        %2187 = vst [vmem:[#allocation3 + $0x20] sm:$0xff] %v2171
        %2188 = vst [vmem:[#allocation3 + $0x28] sm:$0xff] %v2172
        %2189 = vst [vmem:[#allocation3 + $0x30] sm:$0xff] %v2173
        %2190 = vst [vmem:[#allocation3 + $0x38] sm:$0xff] %v2174
        %2191 = vst [vmem:[#allocation3 + $0x40] sm:$0xff] %v2175
        %2192 = vst [vmem:[#allocation3 + $0x48] sm:$0xff] %v2176
        %2193 = vst [vmem:[#allocation3 + $0x50] sm:$0xff] %v2177
        %2194 = vst [vmem:[#allocation3 + $0x58] sm:$0xff] %v2178
        %2195 = vst [vmem:[#allocation3 + $0x60] sm:$0xff] %v2179
        %2196 = vst [vmem:[#allocation3 + $0x68] sm:$0xff] %v2180
        %2197 = vst [vmem:[#allocation3 + $0x70] sm:$0xff] %v2181
        %2198 = vst [vmem:[#allocation3 + $0x78] sm:$0xff] %v2182
        // Predicated region
        $region61: #{tpu_custom_call.1} parent=47 // pred_check
          %p2199 = pneg %p371
        $region62: #{tpu_custom_call.1} parent=47 // pred_check_branch
          %2201 = sbr.rel (%p2199) target = $region64
        $region63: #{tpu_custom_call.1} parent=47 // pred_region
          %v2202 = vld [vmem:[#allocation3] sm:$0xff]
          %v2203 = vld [vmem:[#allocation3 + $0x8] sm:$0xff]
          %v2204 = vld [vmem:[#allocation3 + $0x10] sm:$0xff]
          %v2205 = vld [vmem:[#allocation3 + $0x18] sm:$0xff]
          %v2206 = vld [vmem:[#allocation3 + $0x20] sm:$0xff]
          %v2207 = vld [vmem:[#allocation3 + $0x28] sm:$0xff]
          %v2208 = vld [vmem:[#allocation3 + $0x30] sm:$0xff]
          %v2209 = vld [vmem:[#allocation3 + $0x38] sm:$0xff]
          %v2210 = vld [vmem:[#allocation3 + $0x40] sm:$0xff]
          %v2211 = vld [vmem:[#allocation3 + $0x48] sm:$0xff]
          %v2212 = vld [vmem:[#allocation3 + $0x50] sm:$0xff]
          %v2213 = vld [vmem:[#allocation3 + $0x58] sm:$0xff]
          %v2214 = vld [vmem:[#allocation3 + $0x60] sm:$0xff]
          %v2215 = vld [vmem:[#allocation3 + $0x68] sm:$0xff]
          %v2216 = vld [vmem:[#allocation3 + $0x70] sm:$0xff]
          %v2217 = vld [vmem:[#allocation3 + $0x78] sm:$0xff]
          %v2218 = vld [vmem:[%s6] sm:$0x1]
          %v2220 = vperm.slane %v2218, 0
          %v2222 = vadd.f32 %v2202, %v2220
          %v2223 = vadd.f32 %v2203, %v2220
          %v2224 = vadd.f32 %v2204, %v2220
          %v2225 = vadd.f32 %v2205, %v2220
          %v2226 = vadd.f32 %v2206, %v2220
          %v2227 = vadd.f32 %v2207, %v2220
          %v2228 = vadd.f32 %v2208, %v2220
          %v2229 = vadd.f32 %v2209, %v2220
          %v2230 = vadd.f32 %v2210, %v2220
          %v2231 = vadd.f32 %v2211, %v2220
          %v2232 = vadd.f32 %v2212, %v2220
          %v2233 = vadd.f32 %v2213, %v2220
          %v2234 = vadd.f32 %v2214, %v2220
          %v2235 = vadd.f32 %v2215, %v2220
          %v2236 = vadd.f32 %v2216, %v2220
          %v2237 = vadd.f32 %v2217, %v2220
          %2238 = vst [vmem:[%s359] sm:$0xff] %v2222
          %2239 = vst [vmem:[%s359 + $0x8] sm:$0xff] %v2223
          %2240 = vst [vmem:[%s359 + $0x10] sm:$0xff] %v2224
          %2241 = vst [vmem:[%s359 + $0x18] sm:$0xff] %v2225
          %2242 = vst [vmem:[%s359 + $0x20] sm:$0xff] %v2226
          %2243 = vst [vmem:[%s359 + $0x28] sm:$0xff] %v2227
          %2244 = vst [vmem:[%s359 + $0x30] sm:$0xff] %v2228
          %2245 = vst [vmem:[%s359 + $0x38] sm:$0xff] %v2229
          %2246 = vst [vmem:[%s359 + $0x40] sm:$0xff] %v2230
          %2247 = vst [vmem:[%s359 + $0x48] sm:$0xff] %v2231
          %2248 = vst [vmem:[%s359 + $0x50] sm:$0xff] %v2232
          %2249 = vst [vmem:[%s359 + $0x58] sm:$0xff] %v2233
          %2250 = vst [vmem:[%s359 + $0x60] sm:$0xff] %v2234
          %2251 = vst [vmem:[%s359 + $0x68] sm:$0xff] %v2235
          %2252 = vst [vmem:[%s359 + $0x70] sm:$0xff] %v2236
          %2253 = vst [vmem:[%s359 + $0x78] sm:$0xff] %v2237
        $region64: #{tpu_custom_call.1} parent=47 // pred_fallthru
          _
        %s2254 = sand.u32 %s212, 1
        %s2255 = scalar_lea.sflag [#allocation6], %s2254
        %s2256 = sand.u32 %s212, 1
        %s2257 = smul.addr %s2256, 128
        %s2258 = scalar_lea.vmem [#allocation9], %s2257
        // Predicated region
        $region65: #{tpu_custom_call.1} parent=47 // pred_check
          %p2259 = pneg %p222
        $region66: #{tpu_custom_call.1} parent=47 // pred_check_branch
          %2261 = sbr.rel (%p2259) target = $region68
        $region67: #{tpu_custom_call.1} parent=47 // pred_region
          %s2262 = smul.u32 16, %s29
          %2264 = vsyncadd %s2255, 0
          %s2265 = smul.addr %s2262, 8
          %s2266 = scalar_lea.hbm %s7, %s2265
          %s2267 = sshll.u32 %s2258, 4
          %s2268 = int_to_ptr.vmem [resolvable:$true] %s2267
          %s2269 = sshll.u32 %s2266, 4
          %s2270 = int_to_ptr.hbm [resolvable:$true] %s2269
          %2275 = dma.vmem_to_hbm [thread:$0]  %s2268, 2048, %s2270, %s2255, 128, 128, 8
        $region68: #{tpu_custom_call.1} parent=47 // pred_fallthru
          _
      $region48: #{tpu_custom_call.1} parent=5 // pred_fallthru
        _
      %p2276 = scmp.le.s32.totalorder 2, %s20
      // Predicated region
      $region69: #{tpu_custom_call.1} parent=5 // pred_check
        %p2277 = pneg %p2276
      $region70: #{tpu_custom_call.1} parent=5 // pred_check_branch
        %2279 = sbr.rel (%p2277) target = $region72
      $region71: #{tpu_custom_call.1} parent=5 // pred_region
        %s2280 = ssub.s32 %s20, 2
        // Predicated region
        $region73: #{tpu_custom_call.1} parent=71 // pred_check
          %p2281 = pneg %p228
        $region74: #{tpu_custom_call.1} parent=71 // pred_check_branch
          %2283 = sbr.rel (%p2281) target = $region76
        $region75: #{tpu_custom_call.1} parent=71 // pred_region
          %s2284 = sand.u32 %s213, 1
          %s2285 = scalar_lea.sflag [#allocation6], %s2284
          %s2286 = sand.u32 %s213, 1
          %s2287 = smul.addr %s2286, 128
          %s2288 = scalar_lea.vmem [#allocation9], %s2287
          %2290 = dma.done %s2285, 2048
        $region76: #{tpu_custom_call.1} parent=71 // pred_fallthru
          _
      $region72: #{tpu_custom_call.1} parent=5 // pred_fallthru
        _
    $region6: #{tpu_custom_call.1} parent=1 // loop_footer
      %s24 = sadd.s32 1, %s20
    $region7: #{tpu_custom_call.1} parent=1 // loop_footer_branch
      %19 = sbr.rel target = $region3
    $region8: #{tpu_custom_call.1} parent=1 // loop_exit
      _
    %2291 = vsyncpa [#allocation5], 1
    %s2292 = scalar_lea.sflag [#allocation5], 1
    %2293 = vsyncpa %s2292, 1
    %2294 = vsyncpa [#allocation8], 1
    %2295 = vsyncpa [#allocation6], 1
    %s2296 = scalar_lea.sflag [#allocation6], 1
    %2297 = vsyncpa %s2296, 1

</llo_original>
